<compile_context>
chip_gen: v6e
topology: v6e:2x2x1
jax: 0.10.0
libtpu: 0.0.40
codegen_flags: <defaults>
</compile_context>

<pallas_src>
import math
import jax
import jax.numpy as jnp
from jax.experimental import pallas as pl
from jax.experimental.pallas import tpu as pltpu

# ---- BERT tutorial hyperparameters (small, consistent with the module) ----
d_model = 32
d_k = 8
d_v = 8
n_heads = 4
SEQ = 8
BATCH = 2
LN_EPS = 1e-5
NEG_INF = -1e9


def mha_kernel(q_ref, k_ref, v_ref, madd_ref,
               wq_ref, bq_ref, wk_ref, bk_ref, wv_ref, bv_ref,
               wo_ref, bo_ref, gamma_ref, beta_ref,
               out_ref, attn_ref):
    """Grid = (batch,). All heads are processed inside one invocation."""
    q_in = q_ref[0]                      # (S, d_model)
    k_in = k_ref[0]                      # (S, d_model)
    v_in = v_ref[0]                      # (S, d_model)
    mask_add = madd_ref[0]               # (S, S) additive mask: 0 or -1e9

    # Head-fused projections: one full-width matmul each (covers all heads at once).
    q_all = jnp.dot(q_in, wq_ref[...], preferred_element_type=jnp.float32) + bq_ref[...]  # (S, H*d_k)
    k_all = jnp.dot(k_in, wk_ref[...], preferred_element_type=jnp.float32) + bk_ref[...]  # (S, H*d_k)
    v_all = jnp.dot(v_in, wv_ref[...], preferred_element_type=jnp.float32) + bv_ref[...]  # (S, H*d_v)

    inv_sqrt_dk = 1.0 / math.sqrt(d_k)
    ctx_parts = []
    attn_parts = []
    for h in range(n_heads):             # static unroll (n_heads = 4)
        qh = q_all[:, h * d_k:(h + 1) * d_k]          # (S, d_k) static slices
        kh = k_all[:, h * d_k:(h + 1) * d_k]
        vh = v_all[:, h * d_v:(h + 1) * d_v]
        # scores = q @ k^T / sqrt(d_k) + additive mask
        scores = jax.lax.dot_general(qh, kh, (((1,), (1,)), ((), ())),
                                     preferred_element_type=jnp.float32)
        scores = scores * inv_sqrt_dk + mask_add       # (S, S)
        s_max = jnp.max(scores, axis=-1, keepdims=True)
        p = jnp.exp(scores - s_max)
        attn_h = p * pl.reciprocal(jnp.sum(p, axis=-1, keepdims=True), approx=True)
        attn_parts.append(attn_h)
        ctx_parts.append(jnp.dot(attn_h, vh, preferred_element_type=jnp.float32))  # (S, d_v)

    context = jnp.concatenate(ctx_parts, axis=-1)      # (S, H*d_v), head-major columns
    attn_cat = jnp.concatenate(attn_parts, axis=-1)    # (S, H*S), layout [q, h*S + k]

    # Output projection + residual + LayerNorm (single matmul for all heads).
    out_proj = jnp.dot(context, wo_ref[...], preferred_element_type=jnp.float32) + bo_ref[...]
    x = out_proj + q_in                                # residual (= Q)
    mean = jnp.mean(x, axis=-1, keepdims=True)
    var = jnp.mean((x - mean) ** 2, axis=-1, keepdims=True)
    normed = (x - mean) * jax.lax.rsqrt(var + LN_EPS)
    out_ref[0] = (normed * gamma_ref[...] + beta_ref[...]).astype(out_ref.dtype)
    attn_ref[0] = attn_cat.astype(attn_ref.dtype)


def multi_head_attention(Q, K, V, attn_mask, params):
    B, S, D = Q.shape
    H, dk, dv = n_heads, d_k, d_v

    # Additive mask precomputed in the wrapper (0 where kept, -1e9 where masked).
    mask_add = attn_mask.astype(jnp.float32) * jnp.float32(NEG_INF)   # (B, S, S)

    wq = params["W_Q"]                         # (D, H*dk)
    wk = params["W_K"]                         # (D, H*dk)
    wv = params["W_V"]                         # (D, H*dv)
    wo = params["W_O"]                         # (H*dv, D)
    bq = params["b_Q"].reshape(1, H * dk)
    bk = params["b_K"].reshape(1, H * dk)
    bv = params["b_V"].reshape(1, H * dv)
    bo = params["b_O"].reshape(1, D)
    gamma = params["ln_gamma"].reshape(1, D)
    beta = params["ln_beta"].reshape(1, D)

    batch_spec = lambda blk: pl.BlockSpec(blk, lambda b: (b, 0, 0))
    vmem_full = pl.BlockSpec(memory_space=pltpu.MemorySpace.VMEM)   # untiled, resident

    out, attn_flat = pl.pallas_call(
        mha_kernel,
        out_shape=(
            jax.ShapeDtypeStruct((B, S, D), jnp.float32),
            jax.ShapeDtypeStruct((B, S, H * S), jnp.float32),
        ),
        grid=(B,),
        in_specs=[
            batch_spec((1, S, D)),      # Q
            batch_spec((1, S, D)),      # K
            batch_spec((1, S, D)),      # V
            batch_spec((1, S, S)),      # additive mask
            vmem_full, vmem_full,       # W_Q, b_Q
            vmem_full, vmem_full,       # W_K, b_K
            vmem_full, vmem_full,       # W_V, b_V
            vmem_full, vmem_full,       # W_O, b_O
            vmem_full, vmem_full,       # ln_gamma, ln_beta
        ],
        out_specs=(
            batch_spec((1, S, D)),           # normed output
            batch_spec((1, S, H * S)),       # attention probs (lane-concatenated)
        ),
        compiler_params=pltpu.CompilerParams(
            dimension_semantics=("parallel",)),
    )(Q, K, V, mask_add, wq, bq, wk, bk, wv, bv, wo, bo, gamma, beta)

    # (B, S, H*S) -> (B, H, S, S): plain-JAX layout glue outside the kernel.
    attn = attn_flat.reshape(B, S, H, S).transpose(0, 2, 1, 3)
    return out, attn


def mha_reference(Q, K, V, attn_mask, params):
    """Pure-JAX reference mirroring the PyTorch forward."""
    B, S, D = Q.shape
    H, dk, dv = n_heads, d_k, d_v
    q = (Q @ params["W_Q"] + params["b_Q"]).reshape(B, S, H, dk).transpose(0, 2, 1, 3)
    k = (K @ params["W_K"] + params["b_K"]).reshape(B, S, H, dk).transpose(0, 2, 1, 3)
    v = (V @ params["W_V"] + params["b_V"]).reshape(B, S, H, dv).transpose(0, 2, 1, 3)
    scores = jnp.einsum("bhqd,bhkd->bhqk", q, k) / math.sqrt(dk)
    scores = jnp.where(attn_mask[:, None, :, :] > 0, -1e9, scores)
    attn = jax.nn.softmax(scores, axis=-1)
    ctx = jnp.einsum("bhqk,bhkd->bhqd", attn, v)
    ctx = ctx.transpose(0, 2, 1, 3).reshape(B, S, H * dv)
    out = ctx @ params["W_O"] + params["b_O"]
    x = out + Q
    mean = x.mean(-1, keepdims=True)
    var = ((x - mean) ** 2).mean(-1, keepdims=True)
    normed = (x - mean) / jnp.sqrt(var + LN_EPS)
    return normed * params["ln_gamma"] + params["ln_beta"], attn


if __name__ == "__main__":
    key = jax.random.PRNGKey(0)
    ks = jax.random.split(key, 10)

    Q = jax.random.normal(ks[0], (BATCH, SEQ, d_model), jnp.float32)
    K = Q  # self-attention, as used in BERT
    V = Q

    # Padding mask: tokens >= length are masked (True == masked, like the torch bool mask)
    lengths = jnp.array([6, 5], dtype=jnp.int32)
    key_pos = jnp.arange(SEQ)[None, :] >= lengths[:, None]              # (B, S)
    attn_mask = jnp.broadcast_to(key_pos[:, None, :], (BATCH, SEQ, SEQ))

    scale = 0.1
    params = {
        "W_Q": scale * jax.random.normal(ks[1], (d_model, n_heads * d_k), jnp.float32),
        "b_Q": scale * jax.random.normal(ks[2], (n_heads * d_k,), jnp.float32),
        "W_K": scale * jax.random.normal(ks[3], (d_model, n_heads * d_k), jnp.float32),
        "b_K": scale * jax.random.normal(ks[4], (n_heads * d_k,), jnp.float32),
        "W_V": scale * jax.random.normal(ks[5], (d_model, n_heads * d_v), jnp.float32),
        "b_V": scale * jax.random.normal(ks[6], (n_heads * d_v,), jnp.float32),
        # NOTE: the PyTorch module creates nn.Linear / nn.LayerNorm inside forward()
        # (fresh random weights every call); we initialize them deterministically here.
        "W_O": scale * jax.random.normal(ks[7], (n_heads * d_v, d_model), jnp.float32),
        "b_O": scale * jax.random.normal(ks[8], (d_model,), jnp.float32),
        "ln_gamma": jnp.ones((d_model,), jnp.float32),
        "ln_beta": jnp.zeros((d_model,), jnp.float32),
    }

    out, attn = multi_head_attention(Q, K, V, attn_mask, params)
    out = jax.block_until_ready(out)
    attn = jax.block_until_ready(attn)

    ref_out, ref_attn = mha_reference(Q, K, V, attn_mask, params)
    assert out.shape == (BATCH, SEQ, d_model)
    assert attn.shape == (BATCH, n_heads, SEQ, SEQ)
    assert jnp.allclose(out, ref_out, atol=1e-3, rtol=1e-3)
    assert jnp.allclose(attn, ref_attn, atol=1e-3, rtol=1e-3)
    print("KERNEL_OK")
</pallas_src>

<mosaic_0001>
module attributes {stable_mosaic.version = 11 : i64} {
  func.func @mha_kernel(%arg0: i32, %arg1: memref<1x8x32xf32, #tpu.memory_space<vmem>>, %arg2: memref<1x8x32xf32, #tpu.memory_space<vmem>>, %arg3: memref<1x8x32xf32, #tpu.memory_space<vmem>>, %arg4: memref<1x8x8xf32, #tpu.memory_space<vmem>>, %arg5: memref<32x32xf32, #tpu.memory_space<vmem>>, %arg6: memref<1x32xf32, #tpu.memory_space<vmem>>, %arg7: memref<32x32xf32, #tpu.memory_space<vmem>>, %arg8: memref<1x32xf32, #tpu.memory_space<vmem>>, %arg9: memref<32x32xf32, #tpu.memory_space<vmem>>, %arg10: memref<1x32xf32, #tpu.memory_space<vmem>>, %arg11: memref<32x32xf32, #tpu.memory_space<vmem>>, %arg12: memref<1x32xf32, #tpu.memory_space<vmem>>, %arg13: memref<1x32xf32, #tpu.memory_space<vmem>>, %arg14: memref<1x32xf32, #tpu.memory_space<vmem>>, %arg15: memref<1x8x32xf32, #tpu.memory_space<vmem>>, %arg16: memref<1x8x32xf32, #tpu.memory_space<vmem>>) attributes {dimension_semantics = [#tpu.dimension_semantics<parallel>], iteration_bounds = array<i64: 2>, scalar_prefetch = 0 : i64, scratch_operands = 0 : i64, tpu.core_type = #tpu.core_type<tc>, window_params = [{transform_indices = @transform_0, window_bounds = array<i64: 1, 8, 32>}, {transform_indices = @transform_1, window_bounds = array<i64: 1, 8, 32>}, {transform_indices = @transform_2, window_bounds = array<i64: 1, 8, 32>}, {transform_indices = @transform_3, window_bounds = array<i64: 1, 8, 8>}, {pipeline_mode = #tpu.pipeline_mode<synchronous>, transform_indices = @transform_4, window_bounds = array<i64: 32, 32>}, {pipeline_mode = #tpu.pipeline_mode<synchronous>, transform_indices = @transform_5, window_bounds = array<i64: 1, 32>}, {pipeline_mode = #tpu.pipeline_mode<synchronous>, transform_indices = @transform_6, window_bounds = array<i64: 32, 32>}, {pipeline_mode = #tpu.pipeline_mode<synchronous>, transform_indices = @transform_7, window_bounds = array<i64: 1, 32>}, {pipeline_mode = #tpu.pipeline_mode<synchronous>, transform_indices = @transform_8, window_bounds = array<i64: 32, 32>}, {pipeline_mode = #tpu.pipeline_mode<synchronous>, transform_indices = @transform_9, window_bounds = array<i64: 1, 32>}, {pipeline_mode = #tpu.pipeline_mode<synchronous>, transform_indices = @transform_10, window_bounds = array<i64: 32, 32>}, {pipeline_mode = #tpu.pipeline_mode<synchronous>, transform_indices = @transform_11, window_bounds = array<i64: 1, 32>}, {pipeline_mode = #tpu.pipeline_mode<synchronous>, transform_indices = @transform_12, window_bounds = array<i64: 1, 32>}, {pipeline_mode = #tpu.pipeline_mode<synchronous>, transform_indices = @transform_13, window_bounds = array<i64: 1, 32>}, {transform_indices = @transform_14, window_bounds = array<i64: 1, 8, 32>}, {transform_indices = @transform_15, window_bounds = array<i64: 1, 8, 32>}]} {
    %c0 = arith.constant 0 : index
    %c0_0 = arith.constant 0 : index
    %c0_1 = arith.constant 0 : index
    %0 = vector.load %arg1[%c0, %c0_0, %c0_1] : memref<1x8x32xf32, #tpu.memory_space<vmem>>, vector<1x8x32xf32>
    %1 = vector.shape_cast %0 : vector<1x8x32xf32> to vector<8x32xf32>
    %c0_2 = arith.constant 0 : index
    %c0_3 = arith.constant 0 : index
    %c0_4 = arith.constant 0 : index
    %2 = vector.load %arg2[%c0_2, %c0_3, %c0_4] : memref<1x8x32xf32, #tpu.memory_space<vmem>>, vector<1x8x32xf32>
    %3 = vector.shape_cast %2 : vector<1x8x32xf32> to vector<8x32xf32>
    %c0_5 = arith.constant 0 : index
    %c0_6 = arith.constant 0 : index
    %c0_7 = arith.constant 0 : index
    %4 = vector.load %arg3[%c0_5, %c0_6, %c0_7] : memref<1x8x32xf32, #tpu.memory_space<vmem>>, vector<1x8x32xf32>
    %5 = vector.shape_cast %4 : vector<1x8x32xf32> to vector<8x32xf32>
    %c0_8 = arith.constant 0 : index
    %c0_9 = arith.constant 0 : index
    %c0_10 = arith.constant 0 : index
    %6 = vector.load %arg4[%c0_8, %c0_9, %c0_10] : memref<1x8x8xf32, #tpu.memory_space<vmem>>, vector<1x8x8xf32>
    %7 = vector.shape_cast %6 : vector<1x8x8xf32> to vector<8x8xf32>
    %c0_11 = arith.constant 0 : index
    %c0_12 = arith.constant 0 : index
    %8 = vector.load %arg5[%c0_11, %c0_12] : memref<32x32xf32, #tpu.memory_space<vmem>>, vector<32x32xf32>
    %cst = arith.constant dense<0.000000e+00> : vector<8x32xf32>
    %9 = tpu.matmul %1, %8, %cst {dimension_numbers = #tpu.dot_dimension_numbers<[1], [0], [0], [1], [0, 0, 1, 1], [], []>} : vector<8x32xf32>, vector<32x32xf32>, vector<8x32xf32> -> vector<8x32xf32>
    %c0_13 = arith.constant 0 : index
    %c0_14 = arith.constant 0 : index
    %10 = vector.load %arg6[%c0_13, %c0_14] : memref<1x32xf32, #tpu.memory_space<vmem>>, vector<1x32xf32>
    %11 = vector.broadcast %10 : vector<1x32xf32> to vector<8x32xf32>
    %12 = arith.addf %9, %11 : vector<8x32xf32>
    %c0_15 = arith.constant 0 : index
    %c0_16 = arith.constant 0 : index
    %13 = vector.load %arg7[%c0_15, %c0_16] : memref<32x32xf32, #tpu.memory_space<vmem>>, vector<32x32xf32>
    %cst_17 = arith.constant dense<0.000000e+00> : vector<8x32xf32>
    %14 = tpu.matmul %3, %13, %cst_17 {dimension_numbers = #tpu.dot_dimension_numbers<[1], [0], [0], [1], [0, 0, 1, 1], [], []>} : vector<8x32xf32>, vector<32x32xf32>, vector<8x32xf32> -> vector<8x32xf32>
    %c0_18 = arith.constant 0 : index
    %c0_19 = arith.constant 0 : index
    %15 = vector.load %arg8[%c0_18, %c0_19] : memref<1x32xf32, #tpu.memory_space<vmem>>, vector<1x32xf32>
    %16 = vector.broadcast %15 : vector<1x32xf32> to vector<8x32xf32>
    %17 = arith.addf %14, %16 : vector<8x32xf32>
    %c0_20 = arith.constant 0 : index
    %c0_21 = arith.constant 0 : index
    %18 = vector.load %arg9[%c0_20, %c0_21] : memref<32x32xf32, #tpu.memory_space<vmem>>, vector<32x32xf32>
    %cst_22 = arith.constant dense<0.000000e+00> : vector<8x32xf32>
    %19 = tpu.matmul %5, %18, %cst_22 {dimension_numbers = #tpu.dot_dimension_numbers<[1], [0], [0], [1], [0, 0, 1, 1], [], []>} : vector<8x32xf32>, vector<32x32xf32>, vector<8x32xf32> -> vector<8x32xf32>
    %c0_23 = arith.constant 0 : index
    %c0_24 = arith.constant 0 : index
    %20 = vector.load %arg10[%c0_23, %c0_24] : memref<1x32xf32, #tpu.memory_space<vmem>>, vector<1x32xf32>
    %21 = vector.broadcast %20 : vector<1x32xf32> to vector<8x32xf32>
    %22 = arith.addf %19, %21 : vector<8x32xf32>
    %23 = vector.extract_strided_slice %12 {offsets = [0, 0], sizes = [8, 8], strides = [1, 1]} : vector<8x32xf32> to vector<8x8xf32>
    %24 = vector.extract_strided_slice %17 {offsets = [0, 0], sizes = [8, 8], strides = [1, 1]} : vector<8x32xf32> to vector<8x8xf32>
    %25 = vector.extract_strided_slice %22 {offsets = [0, 0], sizes = [8, 8], strides = [1, 1]} : vector<8x32xf32> to vector<8x8xf32>
    %cst_25 = arith.constant dense<0.000000e+00> : vector<8x8xf32>
    %26 = tpu.matmul %23, %24, %cst_25 {dimension_numbers = #tpu.dot_dimension_numbers<[1], [1], [0], [0], [0, 0, 1, 0], [], []>} : vector<8x8xf32>, vector<8x8xf32>, vector<8x8xf32> -> vector<8x8xf32>
    %cst_26 = arith.constant 0.353553385 : f32
    %27 = vector.broadcast %cst_26 : f32 to vector<8x8xf32>
    %28 = arith.mulf %26, %27 : vector<8x8xf32>
    %29 = arith.addf %28, %7 : vector<8x8xf32>
    %cst_27 = arith.constant dense<0xFF800000> : vector<8xf32>
    %30 = vector.multi_reduction <maximumf>, %29, %cst_27 [1] : vector<8x8xf32> to vector<8xf32>
    %31 = vector.shape_cast %30 : vector<8xf32> to vector<8x1xf32>
    %32 = vector.broadcast %31 : vector<8x1xf32> to vector<8x8xf32>
    %33 = arith.subf %29, %32 : vector<8x8xf32>
    %34 = math.exp %33 : vector<8x8xf32>
    %cst_28 = arith.constant dense<0.000000e+00> : vector<8xf32>
    %35 = vector.multi_reduction <add>, %34, %cst_28 [1] : vector<8x8xf32> to vector<8xf32>
    %36 = vector.shape_cast %35 : vector<8xf32> to vector<8x1xf32>
    %37 = tpu.reciprocal %36 {approx = true} : vector<8x1xf32> -> vector<8x1xf32>
    %38 = vector.broadcast %37 : vector<8x1xf32> to vector<8x8xf32>
    %39 = arith.mulf %34, %38 : vector<8x8xf32>
    %cst_29 = arith.constant dense<0.000000e+00> : vector<8x8xf32>
    %40 = tpu.matmul %39, %25, %cst_29 {dimension_numbers = #tpu.dot_dimension_numbers<[1], [0], [0], [1], [0, 0, 1, 1], [], []>} : vector<8x8xf32>, vector<8x8xf32>, vector<8x8xf32> -> vector<8x8xf32>
    %41 = vector.extract_strided_slice %12 {offsets = [0, 8], sizes = [8, 8], strides = [1, 1]} : vector<8x32xf32> to vector<8x8xf32>
    %42 = vector.extract_strided_slice %17 {offsets = [0, 8], sizes = [8, 8], strides = [1, 1]} : vector<8x32xf32> to vector<8x8xf32>
    %43 = vector.extract_strided_slice %22 {offsets = [0, 8], sizes = [8, 8], strides = [1, 1]} : vector<8x32xf32> to vector<8x8xf32>
    %cst_30 = arith.constant dense<0.000000e+00> : vector<8x8xf32>
    %44 = tpu.matmul %41, %42, %cst_30 {dimension_numbers = #tpu.dot_dimension_numbers<[1], [1], [0], [0], [0, 0, 1, 0], [], []>} : vector<8x8xf32>, vector<8x8xf32>, vector<8x8xf32> -> vector<8x8xf32>
    %cst_31 = arith.constant 0.353553385 : f32
    %45 = vector.broadcast %cst_31 : f32 to vector<8x8xf32>
    %46 = arith.mulf %44, %45 : vector<8x8xf32>
    %47 = arith.addf %46, %7 : vector<8x8xf32>
    %cst_32 = arith.constant dense<0xFF800000> : vector<8xf32>
    %48 = vector.multi_reduction <maximumf>, %47, %cst_32 [1] : vector<8x8xf32> to vector<8xf32>
    %49 = vector.shape_cast %48 : vector<8xf32> to vector<8x1xf32>
    %50 = vector.broadcast %49 : vector<8x1xf32> to vector<8x8xf32>
    %51 = arith.subf %47, %50 : vector<8x8xf32>
    %52 = math.exp %51 : vector<8x8xf32>
    %cst_33 = arith.constant dense<0.000000e+00> : vector<8xf32>
    %53 = vector.multi_reduction <add>, %52, %cst_33 [1] : vector<8x8xf32> to vector<8xf32>
    %54 = vector.shape_cast %53 : vector<8xf32> to vector<8x1xf32>
    %55 = tpu.reciprocal %54 {approx = true} : vector<8x1xf32> -> vector<8x1xf32>
    %56 = vector.broadcast %55 : vector<8x1xf32> to vector<8x8xf32>
    %57 = arith.mulf %52, %56 : vector<8x8xf32>
    %cst_34 = arith.constant dense<0.000000e+00> : vector<8x8xf32>
    %58 = tpu.matmul %57, %43, %cst_34 {dimension_numbers = #tpu.dot_dimension_numbers<[1], [0], [0], [1], [0, 0, 1, 1], [], []>} : vector<8x8xf32>, vector<8x8xf32>, vector<8x8xf32> -> vector<8x8xf32>
    %59 = vector.extract_strided_slice %12 {offsets = [0, 16], sizes = [8, 8], strides = [1, 1]} : vector<8x32xf32> to vector<8x8xf32>
    %60 = vector.extract_strided_slice %17 {offsets = [0, 16], sizes = [8, 8], strides = [1, 1]} : vector<8x32xf32> to vector<8x8xf32>
    %61 = vector.extract_strided_slice %22 {offsets = [0, 16], sizes = [8, 8], strides = [1, 1]} : vector<8x32xf32> to vector<8x8xf32>
    %cst_35 = arith.constant dense<0.000000e+00> : vector<8x8xf32>
    %62 = tpu.matmul %59, %60, %cst_35 {dimension_numbers = #tpu.dot_dimension_numbers<[1], [1], [0], [0], [0, 0, 1, 0], [], []>} : vector<8x8xf32>, vector<8x8xf32>, vector<8x8xf32> -> vector<8x8xf32>
    %cst_36 = arith.constant 0.353553385 : f32
    %63 = vector.broadcast %cst_36 : f32 to vector<8x8xf32>
    %64 = arith.mulf %62, %63 : vector<8x8xf32>
    %65 = arith.addf %64, %7 : vector<8x8xf32>
    %cst_37 = arith.constant dense<0xFF800000> : vector<8xf32>
    %66 = vector.multi_reduction <maximumf>, %65, %cst_37 [1] : vector<8x8xf32> to vector<8xf32>
    %67 = vector.shape_cast %66 : vector<8xf32> to vector<8x1xf32>
    %68 = vector.broadcast %67 : vector<8x1xf32> to vector<8x8xf32>
    %69 = arith.subf %65, %68 : vector<8x8xf32>
    %70 = math.exp %69 : vector<8x8xf32>
    %cst_38 = arith.constant dense<0.000000e+00> : vector<8xf32>
    %71 = vector.multi_reduction <add>, %70, %cst_38 [1] : vector<8x8xf32> to vector<8xf32>
    %72 = vector.shape_cast %71 : vector<8xf32> to vector<8x1xf32>
    %73 = tpu.reciprocal %72 {approx = true} : vector<8x1xf32> -> vector<8x1xf32>
    %74 = vector.broadcast %73 : vector<8x1xf32> to vector<8x8xf32>
    %75 = arith.mulf %70, %74 : vector<8x8xf32>
    %cst_39 = arith.constant dense<0.000000e+00> : vector<8x8xf32>
    %76 = tpu.matmul %75, %61, %cst_39 {dimension_numbers = #tpu.dot_dimension_numbers<[1], [0], [0], [1], [0, 0, 1, 1], [], []>} : vector<8x8xf32>, vector<8x8xf32>, vector<8x8xf32> -> vector<8x8xf32>
    %77 = vector.extract_strided_slice %12 {offsets = [0, 24], sizes = [8, 8], strides = [1, 1]} : vector<8x32xf32> to vector<8x8xf32>
    %78 = vector.extract_strided_slice %17 {offsets = [0, 24], sizes = [8, 8], strides = [1, 1]} : vector<8x32xf32> to vector<8x8xf32>
    %79 = vector.extract_strided_slice %22 {offsets = [0, 24], sizes = [8, 8], strides = [1, 1]} : vector<8x32xf32> to vector<8x8xf32>
    %cst_40 = arith.constant dense<0.000000e+00> : vector<8x8xf32>
    %80 = tpu.matmul %77, %78, %cst_40 {dimension_numbers = #tpu.dot_dimension_numbers<[1], [1], [0], [0], [0, 0, 1, 0], [], []>} : vector<8x8xf32>, vector<8x8xf32>, vector<8x8xf32> -> vector<8x8xf32>
    %cst_41 = arith.constant 0.353553385 : f32
    %81 = vector.broadcast %cst_41 : f32 to vector<8x8xf32>
    %82 = arith.mulf %80, %81 : vector<8x8xf32>
    %83 = arith.addf %82, %7 : vector<8x8xf32>
    %cst_42 = arith.constant dense<0xFF800000> : vector<8xf32>
    %84 = vector.multi_reduction <maximumf>, %83, %cst_42 [1] : vector<8x8xf32> to vector<8xf32>
    %85 = vector.shape_cast %84 : vector<8xf32> to vector<8x1xf32>
    %86 = vector.broadcast %85 : vector<8x1xf32> to vector<8x8xf32>
    %87 = arith.subf %83, %86 : vector<8x8xf32>
    %88 = math.exp %87 : vector<8x8xf32>
    %cst_43 = arith.constant dense<0.000000e+00> : vector<8xf32>
    %89 = vector.multi_reduction <add>, %88, %cst_43 [1] : vector<8x8xf32> to vector<8xf32>
    %90 = vector.shape_cast %89 : vector<8xf32> to vector<8x1xf32>
    %91 = tpu.reciprocal %90 {approx = true} : vector<8x1xf32> -> vector<8x1xf32>
    %92 = vector.broadcast %91 : vector<8x1xf32> to vector<8x8xf32>
    %93 = arith.mulf %88, %92 : vector<8x8xf32>
    %cst_44 = arith.constant dense<0.000000e+00> : vector<8x8xf32>
    %94 = tpu.matmul %93, %79, %cst_44 {dimension_numbers = #tpu.dot_dimension_numbers<[1], [0], [0], [1], [0, 0, 1, 1], [], []>} : vector<8x8xf32>, vector<8x8xf32>, vector<8x8xf32> -> vector<8x8xf32>
    %95 = tpu.concatenate %40, %58, %76, %94 in 1 : vector<8x8xf32>, vector<8x8xf32>, vector<8x8xf32>, vector<8x8xf32> -> vector<8x32xf32>
    %96 = tpu.concatenate %39, %57, %75, %93 in 1 : vector<8x8xf32>, vector<8x8xf32>, vector<8x8xf32>, vector<8x8xf32> -> vector<8x32xf32>
    %c0_45 = arith.constant 0 : index
    %c0_46 = arith.constant 0 : index
    %97 = vector.load %arg11[%c0_45, %c0_46] : memref<32x32xf32, #tpu.memory_space<vmem>>, vector<32x32xf32>
    %cst_47 = arith.constant dense<0.000000e+00> : vector<8x32xf32>
    %98 = tpu.matmul %95, %97, %cst_47 {dimension_numbers = #tpu.dot_dimension_numbers<[1], [0], [0], [1], [0, 0, 1, 1], [], []>} : vector<8x32xf32>, vector<32x32xf32>, vector<8x32xf32> -> vector<8x32xf32>
    %c0_48 = arith.constant 0 : index
    %c0_49 = arith.constant 0 : index
    %99 = vector.load %arg12[%c0_48, %c0_49] : memref<1x32xf32, #tpu.memory_space<vmem>>, vector<1x32xf32>
    %100 = vector.broadcast %99 : vector<1x32xf32> to vector<8x32xf32>
    %101 = arith.addf %98, %100 : vector<8x32xf32>
    %102 = arith.addf %101, %1 : vector<8x32xf32>
    %cst_50 = arith.constant dense<0.000000e+00> : vector<8xf32>
    %103 = vector.multi_reduction <add>, %102, %cst_50 [1] : vector<8x32xf32> to vector<8xf32>
    %104 = vector.shape_cast %103 : vector<8xf32> to vector<8x1xf32>
    %cst_51 = arith.constant 3.200000e+01 : f32
    %105 = vector.broadcast %cst_51 : f32 to vector<8x1xf32>
    %106 = arith.divf %104, %105 : vector<8x1xf32>
    %107 = vector.broadcast %106 : vector<8x1xf32> to vector<8x32xf32>
    %108 = arith.subf %102, %107 : vector<8x32xf32>
    %109 = arith.mulf %108, %108 : vector<8x32xf32>
    %cst_52 = arith.constant dense<0.000000e+00> : vector<8xf32>
    %110 = vector.multi_reduction <add>, %109, %cst_52 [1] : vector<8x32xf32> to vector<8xf32>
    %111 = vector.shape_cast %110 : vector<8xf32> to vector<8x1xf32>
    %cst_53 = arith.constant 3.200000e+01 : f32
    %112 = vector.broadcast %cst_53 : f32 to vector<8x1xf32>
    %113 = arith.divf %111, %112 : vector<8x1xf32>
    %114 = vector.broadcast %106 : vector<8x1xf32> to vector<8x32xf32>
    %115 = arith.subf %102, %114 : vector<8x32xf32>
    %cst_54 = arith.constant 9.99999974E-6 : f32
    %116 = vector.broadcast %cst_54 : f32 to vector<8x1xf32>
    %117 = arith.addf %113, %116 : vector<8x1xf32>
    %118 = math.rsqrt %117 : vector<8x1xf32>
    %119 = vector.broadcast %118 : vector<8x1xf32> to vector<8x32xf32>
    %120 = arith.mulf %115, %119 : vector<8x32xf32>
    %c0_55 = arith.constant 0 : index
    %c0_56 = arith.constant 0 : index
    %121 = vector.load %arg13[%c0_55, %c0_56] : memref<1x32xf32, #tpu.memory_space<vmem>>, vector<1x32xf32>
    %122 = vector.broadcast %121 : vector<1x32xf32> to vector<8x32xf32>
    %123 = arith.mulf %120, %122 : vector<8x32xf32>
    %c0_57 = arith.constant 0 : index
    %c0_58 = arith.constant 0 : index
    %124 = vector.load %arg14[%c0_57, %c0_58] : memref<1x32xf32, #tpu.memory_space<vmem>>, vector<1x32xf32>
    %125 = vector.broadcast %124 : vector<1x32xf32> to vector<8x32xf32>
    %126 = arith.addf %123, %125 : vector<8x32xf32>
    %c0_59 = arith.constant 0 : index
    %c0_60 = arith.constant 0 : index
    %c0_61 = arith.constant 0 : index
    %127 = vector.load %arg15[%c0_59, %c0_60, %c0_61] : memref<1x8x32xf32, #tpu.memory_space<vmem>>, vector<1x8x32xf32>
    %128 = vector.shape_cast %127 : vector<1x8x32xf32> to vector<8x32xf32>
    %129 = vector.shape_cast %126 : vector<8x32xf32> to vector<1x8x32xf32>
    tpu.vector_store %arg15[%c0_59, %c0_60, %c0_61], %129 {strides = array<i32>} : memref<1x8x32xf32, #tpu.memory_space<vmem>>, vector<1x8x32xf32>,
    %c0_62 = arith.constant 0 : index
    %c0_63 = arith.constant 0 : index
    %c0_64 = arith.constant 0 : index
    %130 = vector.load %arg16[%c0_62, %c0_63, %c0_64] : memref<1x8x32xf32, #tpu.memory_space<vmem>>, vector<1x8x32xf32>
    %131 = vector.shape_cast %130 : vector<1x8x32xf32> to vector<8x32xf32>
    %132 = vector.shape_cast %96 : vector<8x32xf32> to vector<1x8x32xf32>
    tpu.vector_store %arg16[%c0_62, %c0_63, %c0_64], %132 {strides = array<i32>} : memref<1x8x32xf32, #tpu.memory_space<vmem>>, vector<1x8x32xf32>,
    return
  }
  func.func @transform_0(%arg0: i32) -> (i32, i32, i32) {
    %c0_i32 = arith.constant 0 : i32
    %c0_i32_0 = arith.constant 0 : i32
    %c0_i32_1 = arith.constant 0 : i32
    return %arg0, %c0_i32, %c0_i32_0 : i32, i32, i32
  }
  func.func @transform_1(%arg0: i32) -> (i32, i32, i32) {
    %c0_i32 = arith.constant 0 : i32
    %c0_i32_0 = arith.constant 0 : i32
    %c0_i32_1 = arith.constant 0 : i32
    return %arg0, %c0_i32, %c0_i32_0 : i32, i32, i32
  }
  func.func @transform_2(%arg0: i32) -> (i32, i32, i32) {
    %c0_i32 = arith.constant 0 : i32
    %c0_i32_0 = arith.constant 0 : i32
    %c0_i32_1 = arith.constant 0 : i32
    return %arg0, %c0_i32, %c0_i32_0 : i32, i32, i32
  }
  func.func @transform_3(%arg0: i32) -> (i32, i32, i32) {
    %c0_i32 = arith.constant 0 : i32
    %c0_i32_0 = arith.constant 0 : i32
    %c0_i32_1 = arith.constant 0 : i32
    return %arg0, %c0_i32, %c0_i32_0 : i32, i32, i32
  }
  func.func @transform_4(%arg0: i32) -> (i32, i32) {
    %c0_i32 = arith.constant 0 : i32
    %c0_i32_0 = arith.constant 0 : i32
    %c0_i32_1 = arith.constant 0 : i32
    return %c0_i32, %c0_i32_0 : i32, i32
  }
  func.func @transform_5(%arg0: i32) -> (i32, i32) {
    %c0_i32 = arith.constant 0 : i32
    %c0_i32_0 = arith.constant 0 : i32
    %c0_i32_1 = arith.constant 0 : i32
    return %c0_i32, %c0_i32_0 : i32, i32
  }
  func.func @transform_6(%arg0: i32) -> (i32, i32) {
    %c0_i32 = arith.constant 0 : i32
    %c0_i32_0 = arith.constant 0 : i32
    %c0_i32_1 = arith.constant 0 : i32
    return %c0_i32, %c0_i32_0 : i32, i32
  }
  func.func @transform_7(%arg0: i32) -> (i32, i32) {
    %c0_i32 = arith.constant 0 : i32
    %c0_i32_0 = arith.constant 0 : i32
    %c0_i32_1 = arith.constant 0 : i32
    return %c0_i32, %c0_i32_0 : i32, i32
  }
  func.func @transform_8(%arg0: i32) -> (i32, i32) {
    %c0_i32 = arith.constant 0 : i32
    %c0_i32_0 = arith.constant 0 : i32
    %c0_i32_1 = arith.constant 0 : i32
    return %c0_i32, %c0_i32_0 : i32, i32
  }
  func.func @transform_9(%arg0: i32) -> (i32, i32) {
    %c0_i32 = arith.constant 0 : i32
    %c0_i32_0 = arith.constant 0 : i32
    %c0_i32_1 = arith.constant 0 : i32
    return %c0_i32, %c0_i32_0 : i32, i32
  }
  func.func @transform_10(%arg0: i32) -> (i32, i32) {
    %c0_i32 = arith.constant 0 : i32
    %c0_i32_0 = arith.constant 0 : i32
    %c0_i32_1 = arith.constant 0 : i32
    return %c0_i32, %c0_i32_0 : i32, i32
  }
  func.func @transform_11(%arg0: i32) -> (i32, i32) {
    %c0_i32 = arith.constant 0 : i32
    %c0_i32_0 = arith.constant 0 : i32
    %c0_i32_1 = arith.constant 0 : i32
    return %c0_i32, %c0_i32_0 : i32, i32
  }
  func.func @transform_12(%arg0: i32) -> (i32, i32) {
    %c0_i32 = arith.constant 0 : i32
    %c0_i32_0 = arith.constant 0 : i32
    %c0_i32_1 = arith.constant 0 : i32
    return %c0_i32, %c0_i32_0 : i32, i32
  }
  func.func @transform_13(%arg0: i32) -> (i32, i32) {
    %c0_i32 = arith.constant 0 : i32
    %c0_i32_0 = arith.constant 0 : i32
    %c0_i32_1 = arith.constant 0 : i32
    return %c0_i32, %c0_i32_0 : i32, i32
  }
  func.func @transform_14(%arg0: i32) -> (i32, i32, i32) {
    %c0_i32 = arith.constant 0 : i32
    %c0_i32_0 = arith.constant 0 : i32
    %c0_i32_1 = arith.constant 0 : i32
    return %arg0, %c0_i32, %c0_i32_0 : i32, i32, i32
  }
  func.func @transform_15(%arg0: i32) -> (i32, i32, i32) {
    %c0_i32 = arith.constant 0 : i32
    %c0_i32_0 = arith.constant 0 : i32
    %c0_i32_1 = arith.constant 0 : i32
    return %arg0, %c0_i32, %c0_i32_0 : i32, i32, i32
  }
}

</mosaic_0001>

<llo_original>
// kernel: tpu_custom_call.1
$region0: #{tpu_custom_call.1}
  #allocation0 [shape = 'u32[]', space=smem, size = 0x4, offset = 0x4, fixed_abs, tag = 'smem constant byte address 0x4 - core index']
  #allocation1 [shape = 'u32[144,128]{1,0:T(1,128)}', space=vmem, size = 0x12000, scoped, tag = 'internal scratch']
  %s0 = inlined_call_operand.hbm [shape: f32[2,8,32], index: 0, kind: input, shape index: {}]
  %s1 = inlined_call_operand.hbm [shape: f32[2,8,32], index: 1, kind: input, shape index: {}]
  %s2 = inlined_call_operand.hbm [shape: f32[2,8,32], index: 2, kind: input, shape index: {}]
  %s3 = inlined_call_operand.hbm [shape: f32[2,8,8], index: 3, kind: input, shape index: {}]
  %s4 = inlined_call_operand.hbm [shape: f32[32,32], index: 4, kind: input, shape index: {}]
  %s5 = inlined_call_operand.vmem [shape: f32[1,32], index: 5, kind: input, shape index: {}]
  %s6 = inlined_call_operand.hbm [shape: f32[32,32], index: 6, kind: input, shape index: {}]
  %s7 = inlined_call_operand.vmem [shape: f32[1,32], index: 7, kind: input, shape index: {}]
  %s8 = inlined_call_operand.hbm [shape: f32[32,32], index: 8, kind: input, shape index: {}]
  %s9 = inlined_call_operand.vmem [shape: f32[1,32], index: 9, kind: input, shape index: {}]
  %s10 = inlined_call_operand.hbm [shape: f32[32,32], index: 10, kind: input, shape index: {}]
  %s11 = inlined_call_operand.vmem [shape: f32[1,32], index: 11, kind: input, shape index: {}]
  %s12 = inlined_call_operand.vmem [shape: f32[1,32], index: 12, kind: input, shape index: {}]
  %s13 = inlined_call_operand.vmem [shape: f32[1,32], index: 13, kind: input, shape index: {}]
  %s14 = inlined_call_operand.hbm [shape: f32[2,8,32], index: 14, kind: output, shape index: {0}]
  %s15 = inlined_call_operand.hbm [shape: f32[2,8,32], index: 15, kind: output, shape index: {1}]
  %16 = xla_tuple %s14, %s15
  %s17 = sld [smem:[#allocation0]]
  $region129: #{tpu_custom_call.1} parent=0
    _
  %s19 = ssub.s32 1, %s17
  %s20 = scalar_select 0, %s19, %s17
  $region1: #{tpu_custom_call.1} parent=0
    #allocation2 [shape = 'u8[8192]{0}', space=vmem, size = 0x2000, scoped, tag = 'input window, operand 0']
    #allocation3 [shape = 's32[2]{0}', space=sflag, size = 0x8, scoped, tag = 'scoped memory for tpu_custom_call.1']
    #allocation4 [shape = 's32[2]{0}', space=sflag, size = 0x8, scoped, tag = 'scoped memory for tpu_custom_call.1']
    #allocation5 [shape = 'u8[8192]{0}', space=vmem, size = 0x2000, scoped, tag = 'input window, operand 1']
    #allocation6 [shape = 's32[2]{0}', space=sflag, size = 0x8, scoped, tag = 'scoped memory for tpu_custom_call.1']
    #allocation7 [shape = 'u8[8192]{0}', space=vmem, size = 0x2000, scoped, tag = 'input window, operand 2']
    #allocation8 [shape = 'u8[8192]{0}', space=vmem, size = 0x2000, scoped, tag = 'input window, operand 3']
    #allocation9 [shape = 's32[2]{0}', space=sflag, size = 0x8, scoped, tag = 'scoped memory for tpu_custom_call.1']
    #allocation10 [shape = 'u8[16384]{0}', space=vmem, size = 0x4000, scoped, tag = 'input window, operand 4, single buffered']
    #allocation11 [shape = 'u8[16384]{0}', space=vmem, size = 0x4000, scoped, tag = 'input window, operand 6, single buffered']
    #allocation12 [shape = 's32[1]{0}', space=sflag, size = 0x4, scoped, tag = 'scoped memory for tpu_custom_call.1']
    #allocation13 [shape = 'u8[16384]{0}', space=vmem, size = 0x4000, scoped, tag = 'input window, operand 8, single buffered']
    #allocation14 [shape = 'u8[16384]{0}', space=vmem, size = 0x4000, scoped, tag = 'input window, operand 10, single buffered']
    #allocation15 [shape = 's32[1]{0}', space=sflag, size = 0x4, scoped, tag = 'scoped memory for tpu_custom_call.1']
    #allocation16 [shape = 'u8[8192]{0}', space=vmem, size = 0x2000, scoped, tag = 'output window, operand 0']
    #allocation17 [shape = 'u8[8192]{0}', space=vmem, size = 0x2000, scoped, tag = 'output window, operand 1']
    #allocation18 [shape = 's32[2]{0}', space=sflag, size = 0x8, scoped, tag = 'scoped memory for tpu_custom_call.1']
    %21 = vsyncpa [#allocation3], 0
    %s22 = scalar_lea.sflag [#allocation3], 1
    %23 = vsyncpa %s22, 0
    %24 = vsyncpa [#allocation6], 0
    %s25 = scalar_lea.sflag [#allocation6], 1
    %26 = vsyncpa %s25, 0
    %27 = vsyncpa [#allocation9], 0
    %s28 = scalar_lea.sflag [#allocation9], 1
    %29 = vsyncpa %s28, 0
    %30 = vsyncpa [#allocation12], 0
    %31 = vsyncpa [#allocation15], 0
    %32 = vsyncpa [#allocation4], 0
    %s33 = scalar_lea.sflag [#allocation4], 1
    %34 = vsyncpa %s33, 0
    %35 = vsyncpa [#allocation18], 0
    %s36 = scalar_lea.sflag [#allocation18], 1
    %37 = vsyncpa %s36, 0
    loop: start=0, step=1, limit=4
    $region2: #{tpu_custom_call.1} parent=1 // loop_pre_header
      _
    $region3: #{tpu_custom_call.1} parent=1 // loop_header
      %s39 = sphi 0, %s43
      %p40 = scmp.ge.s32.totalorder %s39, 4
      %s49 = sphi 0, %s51
      %s52 = sphi 0, %s49
      %s53 = sphi 0, %s52
      %s69 = sphi 0, %s53
      %s75 = sphi 0, %s77
      %s78 = sphi 0, %s75
      %s79 = sphi 0, %s78
      %s95 = sphi 0, %s79
      %s101 = sphi 0, %s103
      %s104 = sphi 0, %s101
      %s105 = sphi 0, %s104
      %s121 = sphi 0, %s105
      %s127 = sphi 0, %s129
      %s130 = sphi 0, %s127
      %s131 = sphi 0, %s130
      %s147 = sphi 0, %s131
      %s151 = sphi 0, %s151
      %s153 = sphi 0, %s151
      %s154 = sphi 0, %s153
      %s168 = sphi 0, %s154
      %s172 = sphi 0, %s172
      %s174 = sphi 0, %s172
      %s175 = sphi 0, %s174
      %s189 = sphi 0, %s175
      %s193 = sphi 0, %s193
      %s195 = sphi 0, %s193
      %s196 = sphi 0, %s195
      %s210 = sphi 0, %s196
      %s214 = sphi 0, %s214
      %s216 = sphi 0, %s214
      %s217 = sphi 0, %s216
      %s231 = sphi 0, %s217
      %s235 = sphi 0, %s235
      %s237 = sphi 0, %s235
      %s238 = sphi 0, %s237
      %s252 = sphi 0, %s238
      %s256 = sphi 0, %s256
      %s258 = sphi 0, %s256
      %s259 = sphi 0, %s258
      %s273 = sphi 0, %s259
      %s277 = sphi 0, %s277
      %s279 = sphi 0, %s277
      %s280 = sphi 0, %s279
      %s294 = sphi 0, %s280
      %s298 = sphi 0, %s298
      %s300 = sphi 0, %s298
      %s301 = sphi 0, %s300
      %s315 = sphi 0, %s301
      %s319 = sphi 0, %s319
      %s321 = sphi 0, %s319
      %s322 = sphi 0, %s321
      %s336 = sphi 0, %s322
      %s340 = sphi 0, %s340
      %s342 = sphi 0, %s340
      %s343 = sphi 0, %s342
      %s357 = sphi 0, %s343
      %s363 = sphi 0, %s365
      %s366 = sphi 0, %s363
      %s367 = sphi 0, %s366
      %s383 = sphi 0, %s367
      %s389 = sphi 0, %s391
      %s392 = sphi 0, %s389
      %s393 = sphi 0, %s392
      %s409 = sphi 0, %s393
    $region4: #{tpu_custom_call.1} parent=1 // loop_header_branch
      %42 = sbr.rel (%p40) target = $region8
    $region5: #{tpu_custom_call.1} parent=1 // loop_body
      %s44 = ssub.s32 %s39, 1
      %s45 = ssub.s32 %s39, 2
      %s46 = sadd.s32 %s39, 1
      %s47 = ssub.s32 %s39, %s46
      %p48 = scmp.eq.s32.totalorder %s47, 0
      %s50 = sadd.s32 %s49, 1
      %s51 = scalar_select %p48, %s49, %s50
      %p54 = pneg %p48
      %p55 = scmp.eq.s32.totalorder %s39, 1
      %p56 = por %p54, %p55
      %p57 = scmp.ne.s32.totalorder %s49, %s52
      %p58 = scmp.eq.s32.totalorder %s39, 0
      %p59 = por %p57, %p58
      %p60 = scmp.ne.s32.totalorder %s49, %s52
      %p61 = scmp.eq.s32.totalorder %s44, 1
      %p62 = por %p60, %p61
      %p63 = scmp.ne.s32.totalorder %s52, %s53
      %p64 = scmp.eq.s32.totalorder %s44, 0
      %p65 = por %p63, %p64
      %p66 = scmp.ne.s32.totalorder %s52, %s53
      %p67 = scmp.eq.s32.totalorder %s45, 1
      %p68 = por %p66, %p67
      %p70 = scmp.ne.s32.totalorder %s53, %s69
      %p71 = scmp.eq.s32.totalorder %s45, 0
      %p72 = por %p70, %p71
      %s73 = ssub.s32 %s39, %s46
      %p74 = scmp.eq.s32.totalorder %s73, 0
      %s76 = sadd.s32 %s75, 1
      %s77 = scalar_select %p74, %s75, %s76
      %p80 = pneg %p74
      %p81 = scmp.eq.s32.totalorder %s39, 1
      %p82 = por %p80, %p81
      %p83 = scmp.ne.s32.totalorder %s75, %s78
      %p84 = scmp.eq.s32.totalorder %s39, 0
      %p85 = por %p83, %p84
      %p86 = scmp.ne.s32.totalorder %s75, %s78
      %p87 = scmp.eq.s32.totalorder %s44, 1
      %p88 = por %p86, %p87
      %p89 = scmp.ne.s32.totalorder %s78, %s79
      %p90 = scmp.eq.s32.totalorder %s44, 0
      %p91 = por %p89, %p90
      %p92 = scmp.ne.s32.totalorder %s78, %s79
      %p93 = scmp.eq.s32.totalorder %s45, 1
      %p94 = por %p92, %p93
      %p96 = scmp.ne.s32.totalorder %s79, %s95
      %p97 = scmp.eq.s32.totalorder %s45, 0
      %p98 = por %p96, %p97
      %s99 = ssub.s32 %s39, %s46
      %p100 = scmp.eq.s32.totalorder %s99, 0
      %s102 = sadd.s32 %s101, 1
      %s103 = scalar_select %p100, %s101, %s102
      %p106 = pneg %p100
      %p107 = scmp.eq.s32.totalorder %s39, 1
      %p108 = por %p106, %p107
      %p109 = scmp.ne.s32.totalorder %s101, %s104
      %p110 = scmp.eq.s32.totalorder %s39, 0
      %p111 = por %p109, %p110
      %p112 = scmp.ne.s32.totalorder %s101, %s104
      %p113 = scmp.eq.s32.totalorder %s44, 1
      %p114 = por %p112, %p113
      %p115 = scmp.ne.s32.totalorder %s104, %s105
      %p116 = scmp.eq.s32.totalorder %s44, 0
      %p117 = por %p115, %p116
      %p118 = scmp.ne.s32.totalorder %s104, %s105
      %p119 = scmp.eq.s32.totalorder %s45, 1
      %p120 = por %p118, %p119
      %p122 = scmp.ne.s32.totalorder %s105, %s121
      %p123 = scmp.eq.s32.totalorder %s45, 0
      %p124 = por %p122, %p123
      %s125 = ssub.s32 %s39, %s46
      %p126 = scmp.eq.s32.totalorder %s125, 0
      %s128 = sadd.s32 %s127, 1
      %s129 = scalar_select %p126, %s127, %s128
      %p132 = pneg %p126
      %p133 = scmp.eq.s32.totalorder %s39, 1
      %p134 = por %p132, %p133
      %p135 = scmp.ne.s32.totalorder %s127, %s130
      %p136 = scmp.eq.s32.totalorder %s39, 0
      %p137 = por %p135, %p136
      %p138 = scmp.ne.s32.totalorder %s127, %s130
      %p139 = scmp.eq.s32.totalorder %s44, 1
      %p140 = por %p138, %p139
      %p141 = scmp.ne.s32.totalorder %s130, %s131
      %p142 = scmp.eq.s32.totalorder %s44, 0
      %p143 = por %p141, %p142
      %p144 = scmp.ne.s32.totalorder %s130, %s131
      %p145 = scmp.eq.s32.totalorder %s45, 1
      %p146 = por %p144, %p145
      %p148 = scmp.ne.s32.totalorder %s131, %s147
      %p149 = scmp.eq.s32.totalorder %s45, 0
      %p150 = por %p148, %p149
      %s152 = sadd.s32 %s151, 1
      %p155 = scmp.eq.s32.totalorder %s39, 1
      %p156 = scmp.ne.s32.totalorder %s151, %s153
      %p157 = scmp.eq.s32.totalorder %s39, 0
      %p158 = por %p156, %p157
      %p159 = scmp.ne.s32.totalorder %s151, %s153
      %p160 = scmp.eq.s32.totalorder %s44, 1
      %p161 = por %p159, %p160
      %p162 = scmp.ne.s32.totalorder %s153, %s154
      %p163 = scmp.eq.s32.totalorder %s44, 0
      %p164 = por %p162, %p163
      %p165 = scmp.ne.s32.totalorder %s153, %s154
      %p166 = scmp.eq.s32.totalorder %s45, 1
      %p167 = por %p165, %p166
      %p169 = scmp.ne.s32.totalorder %s154, %s168
      %p170 = scmp.eq.s32.totalorder %s45, 0
      %p171 = por %p169, %p170
      %s173 = sadd.s32 %s172, 1
      %p176 = scmp.eq.s32.totalorder %s39, 1
      %p177 = scmp.ne.s32.totalorder %s172, %s174
      %p178 = scmp.eq.s32.totalorder %s39, 0
      %p179 = por %p177, %p178
      %p180 = scmp.ne.s32.totalorder %s172, %s174
      %p181 = scmp.eq.s32.totalorder %s44, 1
      %p182 = por %p180, %p181
      %p183 = scmp.ne.s32.totalorder %s174, %s175
      %p184 = scmp.eq.s32.totalorder %s44, 0
      %p185 = por %p183, %p184
      %p186 = scmp.ne.s32.totalorder %s174, %s175
      %p187 = scmp.eq.s32.totalorder %s45, 1
      %p188 = por %p186, %p187
      %p190 = scmp.ne.s32.totalorder %s175, %s189
      %p191 = scmp.eq.s32.totalorder %s45, 0
      %p192 = por %p190, %p191
      %s194 = sadd.s32 %s193, 1
      %p197 = scmp.eq.s32.totalorder %s39, 1
      %p198 = scmp.ne.s32.totalorder %s193, %s195
      %p199 = scmp.eq.s32.totalorder %s39, 0
      %p200 = por %p198, %p199
      %p201 = scmp.ne.s32.totalorder %s193, %s195
      %p202 = scmp.eq.s32.totalorder %s44, 1
      %p203 = por %p201, %p202
      %p204 = scmp.ne.s32.totalorder %s195, %s196
      %p205 = scmp.eq.s32.totalorder %s44, 0
      %p206 = por %p204, %p205
      %p207 = scmp.ne.s32.totalorder %s195, %s196
      %p208 = scmp.eq.s32.totalorder %s45, 1
      %p209 = por %p207, %p208
      %p211 = scmp.ne.s32.totalorder %s196, %s210
      %p212 = scmp.eq.s32.totalorder %s45, 0
      %p213 = por %p211, %p212
      %s215 = sadd.s32 %s214, 1
      %p218 = scmp.eq.s32.totalorder %s39, 1
      %p219 = scmp.ne.s32.totalorder %s214, %s216
      %p220 = scmp.eq.s32.totalorder %s39, 0
      %p221 = por %p219, %p220
      %p222 = scmp.ne.s32.totalorder %s214, %s216
      %p223 = scmp.eq.s32.totalorder %s44, 1
      %p224 = por %p222, %p223
      %p225 = scmp.ne.s32.totalorder %s216, %s217
      %p226 = scmp.eq.s32.totalorder %s44, 0
      %p227 = por %p225, %p226
      %p228 = scmp.ne.s32.totalorder %s216, %s217
      %p229 = scmp.eq.s32.totalorder %s45, 1
      %p230 = por %p228, %p229
      %p232 = scmp.ne.s32.totalorder %s217, %s231
      %p233 = scmp.eq.s32.totalorder %s45, 0
      %p234 = por %p232, %p233
      %s236 = sadd.s32 %s235, 1
      %p239 = scmp.eq.s32.totalorder %s39, 1
      %p240 = scmp.ne.s32.totalorder %s235, %s237
      %p241 = scmp.eq.s32.totalorder %s39, 0
      %p242 = por %p240, %p241
      %p243 = scmp.ne.s32.totalorder %s235, %s237
      %p244 = scmp.eq.s32.totalorder %s44, 1
      %p245 = por %p243, %p244
      %p246 = scmp.ne.s32.totalorder %s237, %s238
      %p247 = scmp.eq.s32.totalorder %s44, 0
      %p248 = por %p246, %p247
      %p249 = scmp.ne.s32.totalorder %s237, %s238
      %p250 = scmp.eq.s32.totalorder %s45, 1
      %p251 = por %p249, %p250
      %p253 = scmp.ne.s32.totalorder %s238, %s252
      %p254 = scmp.eq.s32.totalorder %s45, 0
      %p255 = por %p253, %p254
      %s257 = sadd.s32 %s256, 1
      %p260 = scmp.eq.s32.totalorder %s39, 1
      %p261 = scmp.ne.s32.totalorder %s256, %s258
      %p262 = scmp.eq.s32.totalorder %s39, 0
      %p263 = por %p261, %p262
      %p264 = scmp.ne.s32.totalorder %s256, %s258
      %p265 = scmp.eq.s32.totalorder %s44, 1
      %p266 = por %p264, %p265
      %p267 = scmp.ne.s32.totalorder %s258, %s259
      %p268 = scmp.eq.s32.totalorder %s44, 0
      %p269 = por %p267, %p268
      %p270 = scmp.ne.s32.totalorder %s258, %s259
      %p271 = scmp.eq.s32.totalorder %s45, 1
      %p272 = por %p270, %p271
      %p274 = scmp.ne.s32.totalorder %s259, %s273
      %p275 = scmp.eq.s32.totalorder %s45, 0
      %p276 = por %p274, %p275
      %s278 = sadd.s32 %s277, 1
      %p281 = scmp.eq.s32.totalorder %s39, 1
      %p282 = scmp.ne.s32.totalorder %s277, %s279
      %p283 = scmp.eq.s32.totalorder %s39, 0
      %p284 = por %p282, %p283
      %p285 = scmp.ne.s32.totalorder %s277, %s279
      %p286 = scmp.eq.s32.totalorder %s44, 1
      %p287 = por %p285, %p286
      %p288 = scmp.ne.s32.totalorder %s279, %s280
      %p289 = scmp.eq.s32.totalorder %s44, 0
      %p290 = por %p288, %p289
      %p291 = scmp.ne.s32.totalorder %s279, %s280
      %p292 = scmp.eq.s32.totalorder %s45, 1
      %p293 = por %p291, %p292
      %p295 = scmp.ne.s32.totalorder %s280, %s294
      %p296 = scmp.eq.s32.totalorder %s45, 0
      %p297 = por %p295, %p296
      %s299 = sadd.s32 %s298, 1
      %p302 = scmp.eq.s32.totalorder %s39, 1
      %p303 = scmp.ne.s32.totalorder %s298, %s300
      %p304 = scmp.eq.s32.totalorder %s39, 0
      %p305 = por %p303, %p304
      %p306 = scmp.ne.s32.totalorder %s298, %s300
      %p307 = scmp.eq.s32.totalorder %s44, 1
      %p308 = por %p306, %p307
      %p309 = scmp.ne.s32.totalorder %s300, %s301
      %p310 = scmp.eq.s32.totalorder %s44, 0
      %p311 = por %p309, %p310
      %p312 = scmp.ne.s32.totalorder %s300, %s301
      %p313 = scmp.eq.s32.totalorder %s45, 1
      %p314 = por %p312, %p313
      %p316 = scmp.ne.s32.totalorder %s301, %s315
      %p317 = scmp.eq.s32.totalorder %s45, 0
      %p318 = por %p316, %p317
      %s320 = sadd.s32 %s319, 1
      %p323 = scmp.eq.s32.totalorder %s39, 1
      %p324 = scmp.ne.s32.totalorder %s319, %s321
      %p325 = scmp.eq.s32.totalorder %s39, 0
      %p326 = por %p324, %p325
      %p327 = scmp.ne.s32.totalorder %s319, %s321
      %p328 = scmp.eq.s32.totalorder %s44, 1
      %p329 = por %p327, %p328
      %p330 = scmp.ne.s32.totalorder %s321, %s322
      %p331 = scmp.eq.s32.totalorder %s44, 0
      %p332 = por %p330, %p331
      %p333 = scmp.ne.s32.totalorder %s321, %s322
      %p334 = scmp.eq.s32.totalorder %s45, 1
      %p335 = por %p333, %p334
      %p337 = scmp.ne.s32.totalorder %s322, %s336
      %p338 = scmp.eq.s32.totalorder %s45, 0
      %p339 = por %p337, %p338
      %s341 = sadd.s32 %s340, 1
      %p344 = scmp.eq.s32.totalorder %s39, 1
      %p345 = scmp.ne.s32.totalorder %s340, %s342
      %p346 = scmp.eq.s32.totalorder %s39, 0
      %p347 = por %p345, %p346
      %p348 = scmp.ne.s32.totalorder %s340, %s342
      %p349 = scmp.eq.s32.totalorder %s44, 1
      %p350 = por %p348, %p349
      %p351 = scmp.ne.s32.totalorder %s342, %s343
      %p352 = scmp.eq.s32.totalorder %s44, 0
      %p353 = por %p351, %p352
      %p354 = scmp.ne.s32.totalorder %s342, %s343
      %p355 = scmp.eq.s32.totalorder %s45, 1
      %p356 = por %p354, %p355
      %p358 = scmp.ne.s32.totalorder %s343, %s357
      %p359 = scmp.eq.s32.totalorder %s45, 0
      %p360 = por %p358, %p359
      %s361 = ssub.s32 %s39, %s46
      %p362 = scmp.eq.s32.totalorder %s361, 0
      %s364 = sadd.s32 %s363, 1
      %s365 = scalar_select %p362, %s363, %s364
      %p368 = pneg %p362
      %p369 = scmp.eq.s32.totalorder %s39, 1
      %p370 = por %p368, %p369
      %p371 = scmp.ne.s32.totalorder %s363, %s366
      %p372 = scmp.eq.s32.totalorder %s39, 0
      %p373 = por %p371, %p372
      %p374 = scmp.ne.s32.totalorder %s363, %s366
      %p375 = scmp.eq.s32.totalorder %s44, 1
      %p376 = por %p374, %p375
      %p377 = scmp.ne.s32.totalorder %s366, %s367
      %p378 = scmp.eq.s32.totalorder %s44, 0
      %p379 = por %p377, %p378
      %p380 = scmp.ne.s32.totalorder %s366, %s367
      %p381 = scmp.eq.s32.totalorder %s45, 1
      %p382 = por %p380, %p381
      %p384 = scmp.ne.s32.totalorder %s367, %s383
      %p385 = scmp.eq.s32.totalorder %s45, 0
      %p386 = por %p384, %p385
      %s387 = ssub.s32 %s39, %s46
      %p388 = scmp.eq.s32.totalorder %s387, 0
      %s390 = sadd.s32 %s389, 1
      %s391 = scalar_select %p388, %s389, %s390
      %p394 = pneg %p388
      %p395 = scmp.eq.s32.totalorder %s39, 1
      %p396 = por %p394, %p395
      %p397 = scmp.ne.s32.totalorder %s389, %s392
      %p398 = scmp.eq.s32.totalorder %s39, 0
      %p399 = por %p397, %p398
      %p400 = scmp.ne.s32.totalorder %s389, %s392
      %p401 = scmp.eq.s32.totalorder %s44, 1
      %p402 = por %p400, %p401
      %p403 = scmp.ne.s32.totalorder %s392, %s393
      %p404 = scmp.eq.s32.totalorder %s44, 0
      %p405 = por %p403, %p404
      %p406 = scmp.ne.s32.totalorder %s392, %s393
      %p407 = scmp.eq.s32.totalorder %s45, 1
      %p408 = por %p406, %p407
      %p410 = scmp.ne.s32.totalorder %s393, %s409
      %p411 = scmp.eq.s32.totalorder %s45, 0
      %p412 = por %p410, %p411
      %p413 = scmp.le.s32.totalorder 1, %s39
      %p414 = scmp.lt.s32.totalorder %s39, 3
      %p415 = pnand %p413, %p414
      %p416 = pneg %p415
      // Predicated region
      $region9: #{tpu_custom_call.1} parent=5 // pred_check
        _
      $region10: #{tpu_custom_call.1} parent=5 // pred_check_branch
        %418 = sbr.rel (%p415) target = $region12
      $region11: #{tpu_custom_call.1} parent=5 // pred_region
        %s419 = ssub.s32 %s39, 1
        // Predicated region
        $region13: #{tpu_custom_call.1} parent=11 // pred_check
          %p420 = pneg %p164
        $region14: #{tpu_custom_call.1} parent=11 // pred_check_branch
          %422 = sbr.rel (%p420) target = $region16
        $region15: #{tpu_custom_call.1} parent=11 // pred_region
          %s424 = ssub.s32 512, 512
          %425 = vsyncadd [#allocation9], %s424
          %s426 = sshll.u32 [#allocation10], 4
          %s427 = int_to_ptr.vmem [resolvable:$true] %s426
          %432 = dma.hbm_to_vmem [thread:$0]  %s4, 512, %s427, [#allocation9], 128, 128, 8
        $region16: #{tpu_custom_call.1} parent=11 // pred_fallthru
          _
        // Predicated region
        $region17: #{tpu_custom_call.1} parent=11 // pred_check
          %p433 = pneg %p185
        $region18: #{tpu_custom_call.1} parent=11 // pred_check_branch
          %435 = sbr.rel (%p433) target = $region20
        $region19: #{tpu_custom_call.1} parent=11 // pred_region
          _
        $region20: #{tpu_custom_call.1} parent=11 // pred_fallthru
          _
        // Predicated region
        $region21: #{tpu_custom_call.1} parent=11 // pred_check
          %p436 = pneg %p206
        $region22: #{tpu_custom_call.1} parent=11 // pred_check_branch
          %438 = sbr.rel (%p436) target = $region24
        $region23: #{tpu_custom_call.1} parent=11 // pred_region
          %s440 = ssub.s32 512, 512
          %441 = vsyncadd [#allocation12], %s440
          %s442 = sshll.u32 [#allocation11], 4
          %s443 = int_to_ptr.vmem [resolvable:$true] %s442
          %448 = dma.hbm_to_vmem [thread:$0]  %s6, 512, %s443, [#allocation12], 128, 128, 8
        $region24: #{tpu_custom_call.1} parent=11 // pred_fallthru
          _
        // Predicated region
        $region25: #{tpu_custom_call.1} parent=11 // pred_check
          %p449 = pneg %p227
        $region26: #{tpu_custom_call.1} parent=11 // pred_check_branch
          %451 = sbr.rel (%p449) target = $region28
        $region27: #{tpu_custom_call.1} parent=11 // pred_region
          _
        $region28: #{tpu_custom_call.1} parent=11 // pred_fallthru
          _
        // Predicated region
        $region29: #{tpu_custom_call.1} parent=11 // pred_check
          %p452 = pneg %p248
        $region30: #{tpu_custom_call.1} parent=11 // pred_check_branch
          %454 = sbr.rel (%p452) target = $region32
        $region31: #{tpu_custom_call.1} parent=11 // pred_region
          %s456 = ssub.s32 512, 512
          %457 = vsyncadd [#allocation12], %s456
          %s458 = sshll.u32 [#allocation13], 4
          %s459 = int_to_ptr.vmem [resolvable:$true] %s458
          %464 = dma.hbm_to_vmem [thread:$0]  %s8, 512, %s459, [#allocation12], 128, 128, 8
        $region32: #{tpu_custom_call.1} parent=11 // pred_fallthru
          _
        // Predicated region
        $region33: #{tpu_custom_call.1} parent=11 // pred_check
          %p465 = pneg %p269
        $region34: #{tpu_custom_call.1} parent=11 // pred_check_branch
          %467 = sbr.rel (%p465) target = $region36
        $region35: #{tpu_custom_call.1} parent=11 // pred_region
          _
        $region36: #{tpu_custom_call.1} parent=11 // pred_fallthru
          _
        // Predicated region
        $region37: #{tpu_custom_call.1} parent=11 // pred_check
          %p468 = pneg %p290
        $region38: #{tpu_custom_call.1} parent=11 // pred_check_branch
          %470 = sbr.rel (%p468) target = $region40
        $region39: #{tpu_custom_call.1} parent=11 // pred_region
          %s472 = ssub.s32 512, 512
          %473 = vsyncadd [#allocation15], %s472
          %s474 = sshll.u32 [#allocation14], 4
          %s475 = int_to_ptr.vmem [resolvable:$true] %s474
          %480 = dma.hbm_to_vmem [thread:$0]  %s10, 512, %s475, [#allocation15], 128, 128, 8
        $region40: #{tpu_custom_call.1} parent=11 // pred_fallthru
          _
        // Predicated region
        $region41: #{tpu_custom_call.1} parent=11 // pred_check
          %p481 = pneg %p311
        $region42: #{tpu_custom_call.1} parent=11 // pred_check_branch
          %483 = sbr.rel (%p481) target = $region44
        $region43: #{tpu_custom_call.1} parent=11 // pred_region
          _
        $region44: #{tpu_custom_call.1} parent=11 // pred_fallthru
          _
        // Predicated region
        $region45: #{tpu_custom_call.1} parent=11 // pred_check
          %p484 = pneg %p332
        $region46: #{tpu_custom_call.1} parent=11 // pred_check_branch
          %486 = sbr.rel (%p484) target = $region48
        $region47: #{tpu_custom_call.1} parent=11 // pred_region
          _
        $region48: #{tpu_custom_call.1} parent=11 // pred_fallthru
          _
        // Predicated region
        $region49: #{tpu_custom_call.1} parent=11 // pred_check
          %p487 = pneg %p353
        $region50: #{tpu_custom_call.1} parent=11 // pred_check_branch
          %489 = sbr.rel (%p487) target = $region52
        $region51: #{tpu_custom_call.1} parent=11 // pred_region
          _
        $region52: #{tpu_custom_call.1} parent=11 // pred_fallthru
          _
      $region12: #{tpu_custom_call.1} parent=5 // pred_fallthru
        _
      %p490 = scmp.lt.s32.totalorder %s39, 2
      // Predicated region
      $region53: #{tpu_custom_call.1} parent=5 // pred_check
        %p491 = pneg %p490
      $region54: #{tpu_custom_call.1} parent=5 // pred_check_branch
        %493 = sbr.rel (%p491) target = $region56
      $region55: #{tpu_custom_call.1} parent=5 // pred_region
        // Predicated region
        $region57: #{tpu_custom_call.1} parent=55 // pred_check
          %p494 = pneg %p59
        $region58: #{tpu_custom_call.1} parent=55 // pred_check_branch
          %496 = sbr.rel (%p494) target = $region60
        $region59: #{tpu_custom_call.1} parent=55 // pred_region
          %s497 = sand.u32 %s49, 1
          %s498 = scalar_lea.sflag [#allocation3], %s497
          %s499 = sand.u32 %s49, 1
          %s500 = smul.addr %s499, 8
          %s501 = scalar_lea.vmem [#allocation2], %s500
          %s503 = ssub.s32 128, 128
          %504 = vsyncadd %s498, %s503
          %s505 = smul.addr %s39, 128
          %s506 = scalar_lea.hbm %s0, %s505
          %s508 = sshll.u32 %s501, 4
          %s509 = int_to_ptr.vmem [resolvable:$true] %s508
          %511 = dma.hbm_to_vmem [thread:$0]  %s506, 128, %s509, %s498
        $region60: #{tpu_custom_call.1} parent=55 // pred_fallthru
          _
        // Predicated region
        $region61: #{tpu_custom_call.1} parent=55 // pred_check
          %p512 = pneg %p85
        $region62: #{tpu_custom_call.1} parent=55 // pred_check_branch
          %514 = sbr.rel (%p512) target = $region64
        $region63: #{tpu_custom_call.1} parent=55 // pred_region
          %s515 = sand.u32 %s39, 1
          %s516 = scalar_lea.sflag [#allocation6], %s515
          %s517 = sand.u32 %s75, 1
          %s518 = smul.addr %s517, 8
          %s519 = scalar_lea.vmem [#allocation5], %s518
          %s521 = ssub.s32 128, 128
          %522 = vsyncadd %s516, %s521
          %s523 = smul.addr %s39, 128
          %s524 = scalar_lea.hbm %s1, %s523
          %s526 = sshll.u32 %s519, 4
          %s527 = int_to_ptr.vmem [resolvable:$true] %s526
          %529 = dma.hbm_to_vmem [thread:$0]  %s524, 128, %s527, %s516
        $region64: #{tpu_custom_call.1} parent=55 // pred_fallthru
          _
        // Predicated region
        $region65: #{tpu_custom_call.1} parent=55 // pred_check
          %p530 = pneg %p111
        $region66: #{tpu_custom_call.1} parent=55 // pred_check_branch
          %532 = sbr.rel (%p530) target = $region68
        $region67: #{tpu_custom_call.1} parent=55 // pred_region
          %s533 = sand.u32 %s39, 1
          %s534 = scalar_lea.sflag [#allocation6], %s533
          %s535 = sand.u32 %s101, 1
          %s536 = smul.addr %s535, 8
          %s537 = scalar_lea.vmem [#allocation7], %s536
          %s539 = ssub.s32 128, 128
          %540 = vsyncadd %s534, %s539
          %s541 = smul.addr %s39, 128
          %s542 = scalar_lea.hbm %s2, %s541
          %s544 = sshll.u32 %s537, 4
          %s545 = int_to_ptr.vmem [resolvable:$true] %s544
          %547 = dma.hbm_to_vmem [thread:$0]  %s542, 128, %s545, %s534
        $region68: #{tpu_custom_call.1} parent=55 // pred_fallthru
          _
        // Predicated region
        $region69: #{tpu_custom_call.1} parent=55 // pred_check
          %p548 = pneg %p137
        $region70: #{tpu_custom_call.1} parent=55 // pred_check_branch
          %550 = sbr.rel (%p548) target = $region72
        $region71: #{tpu_custom_call.1} parent=55 // pred_region
          %s551 = sand.u32 %s39, 1
          %s552 = scalar_lea.sflag [#allocation9], %s551
          %s553 = sand.u32 %s127, 1
          %s554 = smul.addr %s553, 8
          %s555 = scalar_lea.vmem [#allocation8], %s554
          %s557 = ssub.s32 128, 128
          %558 = vsyncadd %s552, %s557
          %s559 = smul.addr %s39, 128
          %s560 = scalar_lea.hbm %s3, %s559
          %s562 = sshll.u32 %s555, 4
          %s563 = int_to_ptr.vmem [resolvable:$true] %s562
          %565 = dma.hbm_to_vmem [thread:$0]  %s560, 128, %s563, %s552
        $region72: #{tpu_custom_call.1} parent=55 // pred_fallthru
          _
      $region56: #{tpu_custom_call.1} parent=5 // pred_fallthru
        _
      %p566 = scmp.le.s32.totalorder 1, %s39
      %p567 = scmp.lt.s32.totalorder %s39, 3
      %p568 = pnand %p566, %p567
      %p569 = pneg %p568
      // Predicated region
      $region73: #{tpu_custom_call.1} parent=5 // pred_check
        _
      $region74: #{tpu_custom_call.1} parent=5 // pred_check_branch
        %571 = sbr.rel (%p568) target = $region76
      $region75: #{tpu_custom_call.1} parent=5 // pred_region
        %s572 = ssub.s32 %s39, 1
        %s573 = sand.u32 %s52, 1
        %s574 = scalar_lea.sflag [#allocation3], %s573
        %s575 = sand.u32 %s52, 1
        %s576 = smul.addr %s575, 8
        %s577 = scalar_lea.vmem [#allocation2], %s576
        // Predicated region
        $region77: #{tpu_custom_call.1} parent=75 // pred_check
          %p578 = pneg %p65
        $region78: #{tpu_custom_call.1} parent=75 // pred_check_branch
          %580 = sbr.rel (%p578) target = $region80
        $region79: #{tpu_custom_call.1} parent=75 // pred_region
          %581 = dma.done %s574, 128
        $region80: #{tpu_custom_call.1} parent=75 // pred_fallthru
          _
        %s582 = sand.u32 %s44, 1
        %s583 = scalar_lea.sflag [#allocation6], %s582
        %s584 = sand.u32 %s78, 1
        %s585 = smul.addr %s584, 8
        %s586 = scalar_lea.vmem [#allocation5], %s585
        // Predicated region
        $region81: #{tpu_custom_call.1} parent=75 // pred_check
          %p587 = pneg %p91
        $region82: #{tpu_custom_call.1} parent=75 // pred_check_branch
          %589 = sbr.rel (%p587) target = $region84
        $region83: #{tpu_custom_call.1} parent=75 // pred_region
          %590 = dma.done %s583, 128
        $region84: #{tpu_custom_call.1} parent=75 // pred_fallthru
          _
        %s591 = sand.u32 %s44, 1
        %s592 = scalar_lea.sflag [#allocation6], %s591
        %s593 = sand.u32 %s104, 1
        %s594 = smul.addr %s593, 8
        %s595 = scalar_lea.vmem [#allocation7], %s594
        // Predicated region
        $region85: #{tpu_custom_call.1} parent=75 // pred_check
          %p596 = pneg %p117
        $region86: #{tpu_custom_call.1} parent=75 // pred_check_branch
          %598 = sbr.rel (%p596) target = $region88
        $region87: #{tpu_custom_call.1} parent=75 // pred_region
          %599 = dma.done %s592, 128
        $region88: #{tpu_custom_call.1} parent=75 // pred_fallthru
          _
        %s600 = sand.u32 %s44, 1
        %s601 = scalar_lea.sflag [#allocation9], %s600
        %s602 = sand.u32 %s130, 1
        %s603 = smul.addr %s602, 8
        %s604 = scalar_lea.vmem [#allocation8], %s603
        // Predicated region
        $region89: #{tpu_custom_call.1} parent=75 // pred_check
          %p605 = pneg %p143
        $region90: #{tpu_custom_call.1} parent=75 // pred_check_branch
          %607 = sbr.rel (%p605) target = $region92
        $region91: #{tpu_custom_call.1} parent=75 // pred_region
          %608 = dma.done %s601, 128
        $region92: #{tpu_custom_call.1} parent=75 // pred_fallthru
          _
        // Predicated region
        $region93: #{tpu_custom_call.1} parent=75 // pred_check
          %p609 = pneg %p164
        $region94: #{tpu_custom_call.1} parent=75 // pred_check_branch
          %611 = sbr.rel (%p609) target = $region96
        $region95: #{tpu_custom_call.1} parent=75 // pred_region
          %612 = dma.done [#allocation9], 512
        $region96: #{tpu_custom_call.1} parent=75 // pred_fallthru
          _
        // Predicated region
        $region97: #{tpu_custom_call.1} parent=75 // pred_check
          %p613 = pneg %p206
        $region98: #{tpu_custom_call.1} parent=75 // pred_check_branch
          %615 = sbr.rel (%p613) target = $region100
        $region99: #{tpu_custom_call.1} parent=75 // pred_region
          %616 = dma.done [#allocation12], 512
        $region100: #{tpu_custom_call.1} parent=75 // pred_fallthru
          _
        // Predicated region
        $region101: #{tpu_custom_call.1} parent=75 // pred_check
          %p617 = pneg %p248
        $region102: #{tpu_custom_call.1} parent=75 // pred_check_branch
          %619 = sbr.rel (%p617) target = $region104
        $region103: #{tpu_custom_call.1} parent=75 // pred_region
          %620 = dma.done [#allocation12], 512
        $region104: #{tpu_custom_call.1} parent=75 // pred_fallthru
          _
        // Predicated region
        $region105: #{tpu_custom_call.1} parent=75 // pred_check
          %p621 = pneg %p290
        $region106: #{tpu_custom_call.1} parent=75 // pred_check_branch
          %623 = sbr.rel (%p621) target = $region108
        $region107: #{tpu_custom_call.1} parent=75 // pred_region
          %624 = dma.done [#allocation15], 512
        $region108: #{tpu_custom_call.1} parent=75 // pred_fallthru
          _
        %s625 = sand.u32 %s52, 1
        %s626 = scalar_lea.sflag [#allocation3], %s625
        %s627 = sand.u32 %s52, 1
        %s628 = smul.addr %s627, 8
        %s629 = scalar_lea.vmem [#allocation2], %s628
        %p630 = pneg %p65
        %p631 = pneg %p62
        %s632 = sand.u32 %s44, 1
        %s633 = scalar_lea.sflag [#allocation6], %s632
        %s634 = sand.u32 %s78, 1
        %s635 = smul.addr %s634, 8
        %s636 = scalar_lea.vmem [#allocation5], %s635
        %p637 = pneg %p91
        %p638 = pneg %p88
        %s639 = sand.u32 %s44, 1
        %s640 = scalar_lea.sflag [#allocation6], %s639
        %s641 = sand.u32 %s104, 1
        %s642 = smul.addr %s641, 8
        %s643 = scalar_lea.vmem [#allocation7], %s642
        %p644 = pneg %p117
        %p645 = pneg %p114
        %s646 = sand.u32 %s44, 1
        %s647 = scalar_lea.sflag [#allocation9], %s646
        %s648 = sand.u32 %s130, 1
        %s649 = smul.addr %s648, 8
        %s650 = scalar_lea.vmem [#allocation8], %s649
        %p651 = pneg %p143
        %p652 = pneg %p140
        %p653 = pneg %p164
        %p654 = pneg %p161
        %p655 = pneg %p185
        %p656 = pneg %p182
        %p657 = pneg %p206
        %p658 = pneg %p203
        %p659 = pneg %p227
        %p660 = pneg %p224
        %p661 = pneg %p248
        %p662 = pneg %p245
        %p663 = pneg %p269
        %p664 = pneg %p266
        %p665 = pneg %p290
        %p666 = pneg %p287
        %p667 = pneg %p311
        %p668 = pneg %p308
        %p669 = pneg %p332
        %p670 = pneg %p329
        %p671 = pneg %p353
        %p672 = pneg %p350
        %p673 = pneg %p379
        %p674 = pneg %p376
        %s675 = sand.u32 %s366, 1
        %s676 = scalar_lea.sflag [#allocation4], %s675
        %s677 = sand.u32 %s366, 1
        %s678 = smul.addr %s677, 8
        %s679 = scalar_lea.vmem [#allocation16], %s678
        %p680 = pneg %p405
        %p681 = pneg %p402
        %s682 = sand.u32 %s392, 1
        %s683 = scalar_lea.sflag [#allocation18], %s682
        %s684 = sand.u32 %s392, 1
        %s685 = smul.addr %s684, 8
        %s686 = scalar_lea.vmem [#allocation17], %s685
        %v687 = vld [vmem:[%s577] sm:$0xff]
        %v688 = vld [vmem:[%s586] sm:$0xff]
        %v689 = vld [vmem:[%s595] sm:$0xff]
        %v690 = vld [vmem:[%s604] sm:$0xff]
        %v691 = vld [vmem:[#allocation10] sm:$0xff]
        %v692 = vld [vmem:[#allocation10 + $0x8] sm:$0xff]
        %v693 = vld [vmem:[#allocation10 + $0x10] sm:$0xff]
        %v694 = vld [vmem:[#allocation10 + $0x18] sm:$0xff]
        %v695 = vld [vmem:[%s5] sm:$0x1]
        %v697 = vlaneseq
        %v698 = vshrl.u32 %v697, 7
        %v699 = vsub.s32 0, %v698
        %v700 = vrot.slane %v695, %v699
        %vm702 = vcmask 261120
        %v704 = vsel %vm702, %v687, 0
        %706 = vmatprep.subr.mxu0 0.0
        %707 = vmatpush1.msra.mxu0 0.0
        %708 = vmatprep.subr.mxu0 0.0
        %709 = vmatpush1.msra.mxu0 0.0
        %710 = vmatprep.subr.mxu0 0.0
        %711 = vmatpush1.msra.mxu0 0.0
        %712 = vmatprep.subr.mxu0 0.0
        %713 = vmatpush1.msra.mxu0 0.0
        %714 = vmatprep.subr.mxu0 0.0
        %715 = vmatpush1.msra.mxu0 0.0
        %716 = vmatprep.subr.mxu0 0.0
        %717 = vmatpush1.msra.mxu0 0.0
        %718 = vmatprep.subr.mxu0 0.0
        %719 = vmatpush1.msra.mxu0 0.0
        %720 = vmatprep.subr.mxu0 0.0
        %721 = vmatpush1.msra.mxu0 0.0
        %722 = vmatprep.subr.mxu0 0.0
        %723 = vmatpush1.msra.mxu0 0.0
        %724 = vmatprep.subr.mxu0 0.0
        %725 = vmatpush1.msra.mxu0 0.0
        %726 = vmatprep.subr.mxu0 0.0
        %727 = vmatpush1.msra.mxu0 0.0
        %728 = vmatprep.subr.mxu0 0.0
        %729 = vmatpush1.msra.mxu0 0.0
        %730 = vmatprep.subr.mxu0 0.0
        %731 = vmatpush1.msra.mxu0 %v694
        %732 = vmatprep.subr.mxu0 0.0
        %733 = vmatpush1.msra.mxu0 %v693
        %734 = vmatprep.subr.mxu0 0.0
        %735 = vmatpush1.msra.mxu0 %v692
        %736 = vmatprep.subr.mxu0 0.0
        %737 = vmatpush1.msra.mxu0 %v691
        %738 = vmatprep.subr.mxu0 0.0
        %739 = vmatpush2.msra.mxu0 0.0
        %740 = vmatprep.subr.mxu0 0.0
        %741 = vmatpush2.msra.mxu0 0.0
        %742 = vmatprep.subr.mxu0 0.0
        %743 = vmatpush2.msra.mxu0 0.0
        %744 = vmatprep.subr.mxu0 0.0
        %745 = vmatpush2.msra.mxu0 0.0
        %746 = vmatprep.subr.mxu0 0.0
        %747 = vmatpush2.msra.mxu0 0.0
        %748 = vmatprep.subr.mxu0 0.0
        %749 = vmatpush2.msra.mxu0 0.0
        %750 = vmatprep.subr.mxu0 0.0
        %751 = vmatpush2.msra.mxu0 0.0
        %752 = vmatprep.subr.mxu0 0.0
        %753 = vmatpush2.msra.mxu0 0.0
        %754 = vmatprep.subr.mxu0 0.0
        %755 = vmatpush2.msra.mxu0 0.0
        %756 = vmatprep.subr.mxu0 0.0
        %757 = vmatpush2.msra.mxu0 0.0
        %758 = vmatprep.subr.mxu0 0.0
        %759 = vmatpush2.msra.mxu0 0.0
        %760 = vmatprep.subr.mxu0 0.0
        %761 = vmatpush2.msra.mxu0 0.0
        %762 = vmatprep.subr.mxu0 0.0
        %763 = vmatpush2.msra.mxu0 0.0
        %764 = vmatprep.subr.mxu0 0.0
        %765 = vmatpush2.msra.mxu0 0.0
        %766 = vmatprep.subr.mxu0 0.0
        %767 = vmatpush2.msra.mxu0 0.0
        %768 = vmatprep.subr.mxu0 0.0
        %769 = vmatpush2.msra.mxu0 0.0
        %770 = vmatprep.mubr.f32.mxu0 0.0
        %771 = vmatmul.mubr.f32.gmra.mxu0 %v704
        %v772 = vpop.f32.mrf.mxu0
        %v773 = vadd.f32 %v700, %v772
        %v774 = vpop.f32.mrf.mxu0
        %775 = vdwg.mxu0
        %v776 = vld [vmem:[#allocation11] sm:$0xff]
        %v777 = vld [vmem:[#allocation11 + $0x8] sm:$0xff]
        %v778 = vld [vmem:[#allocation11 + $0x10] sm:$0xff]
        %v779 = vld [vmem:[#allocation11 + $0x18] sm:$0xff]
        %v780 = vld [vmem:[%s7] sm:$0x1]
        %v782 = vlaneseq
        %v783 = vshrl.u32 %v782, 7
        %v784 = vsub.s32 0, %v783
        %v785 = vrot.slane %v780, %v784
        %v788 = vsel %vm702, %v688, 0
        %790 = vmatprep.subr.mxu0 0.0
        %791 = vmatpush1.msra.mxu0 0.0
        %792 = vmatprep.subr.mxu0 0.0
        %793 = vmatpush1.msra.mxu0 0.0
        %794 = vmatprep.subr.mxu0 0.0
        %795 = vmatpush1.msra.mxu0 0.0
        %796 = vmatprep.subr.mxu0 0.0
        %797 = vmatpush1.msra.mxu0 0.0
        %798 = vmatprep.subr.mxu0 0.0
        %799 = vmatpush1.msra.mxu0 0.0
        %800 = vmatprep.subr.mxu0 0.0
        %801 = vmatpush1.msra.mxu0 0.0
        %802 = vmatprep.subr.mxu0 0.0
        %803 = vmatpush1.msra.mxu0 0.0
        %804 = vmatprep.subr.mxu0 0.0
        %805 = vmatpush1.msra.mxu0 0.0
        %806 = vmatprep.subr.mxu0 0.0
        %807 = vmatpush1.msra.mxu0 0.0
        %808 = vmatprep.subr.mxu0 0.0
        %809 = vmatpush1.msra.mxu0 0.0
        %810 = vmatprep.subr.mxu0 0.0
        %811 = vmatpush1.msra.mxu0 0.0
        %812 = vmatprep.subr.mxu0 0.0
        %813 = vmatpush1.msra.mxu0 0.0
        %814 = vmatprep.subr.mxu0 0.0
        %815 = vmatpush1.msra.mxu0 %v779
        %816 = vmatprep.subr.mxu0 0.0
        %817 = vmatpush1.msra.mxu0 %v778
        %818 = vmatprep.subr.mxu0 0.0
        %819 = vmatpush1.msra.mxu0 %v777
        %820 = vmatprep.subr.mxu0 0.0
        %821 = vmatpush1.msra.mxu0 %v776
        %822 = vmatprep.subr.mxu0 0.0
        %823 = vmatpush2.msra.mxu0 0.0
        %824 = vmatprep.subr.mxu0 0.0
        %825 = vmatpush2.msra.mxu0 0.0
        %826 = vmatprep.subr.mxu0 0.0
        %827 = vmatpush2.msra.mxu0 0.0
        %828 = vmatprep.subr.mxu0 0.0
        %829 = vmatpush2.msra.mxu0 0.0
        %830 = vmatprep.subr.mxu0 0.0
        %831 = vmatpush2.msra.mxu0 0.0
        %832 = vmatprep.subr.mxu0 0.0
        %833 = vmatpush2.msra.mxu0 0.0
        %834 = vmatprep.subr.mxu0 0.0
        %835 = vmatpush2.msra.mxu0 0.0
        %836 = vmatprep.subr.mxu0 0.0
        %837 = vmatpush2.msra.mxu0 0.0
        %838 = vmatprep.subr.mxu0 0.0
        %839 = vmatpush2.msra.mxu0 0.0
        %840 = vmatprep.subr.mxu0 0.0
        %841 = vmatpush2.msra.mxu0 0.0
        %842 = vmatprep.subr.mxu0 0.0
        %843 = vmatpush2.msra.mxu0 0.0
        %844 = vmatprep.subr.mxu0 0.0
        %845 = vmatpush2.msra.mxu0 0.0
        %846 = vmatprep.subr.mxu0 0.0
        %847 = vmatpush2.msra.mxu0 0.0
        %848 = vmatprep.subr.mxu0 0.0
        %849 = vmatpush2.msra.mxu0 0.0
        %850 = vmatprep.subr.mxu0 0.0
        %851 = vmatpush2.msra.mxu0 0.0
        %852 = vmatprep.subr.mxu0 0.0
        %853 = vmatpush2.msra.mxu0 0.0
        %854 = vmatprep.mubr.f32.mxu0 0.0
        %855 = vmatmul.mubr.f32.gmra.mxu0 %v788
        %v856 = vpop.f32.mrf.mxu0
        %v857 = vadd.f32 %v785, %v856
        %v858 = vpop.f32.mrf.mxu0
        %859 = vdwg.mxu0
        %v860 = vld [vmem:[#allocation13] sm:$0xff]
        %v861 = vld [vmem:[#allocation13 + $0x8] sm:$0xff]
        %v862 = vld [vmem:[#allocation13 + $0x10] sm:$0xff]
        %v863 = vld [vmem:[#allocation13 + $0x18] sm:$0xff]
        %v864 = vld [vmem:[%s9] sm:$0x1]
        %v866 = vlaneseq
        %v867 = vshrl.u32 %v866, 7
        %v868 = vsub.s32 0, %v867
        %v869 = vrot.slane %v864, %v868
        %v872 = vsel %vm702, %v689, 0
        %874 = vmatprep.subr.mxu0 0.0
        %875 = vmatpush1.msra.mxu0 0.0
        %876 = vmatprep.subr.mxu0 0.0
        %877 = vmatpush1.msra.mxu0 0.0
        %878 = vmatprep.subr.mxu0 0.0
        %879 = vmatpush1.msra.mxu0 0.0
        %880 = vmatprep.subr.mxu0 0.0
        %881 = vmatpush1.msra.mxu0 0.0
        %882 = vmatprep.subr.mxu0 0.0
        %883 = vmatpush1.msra.mxu0 0.0
        %884 = vmatprep.subr.mxu0 0.0
        %885 = vmatpush1.msra.mxu0 0.0
        %886 = vmatprep.subr.mxu0 0.0
        %887 = vmatpush1.msra.mxu0 0.0
        %888 = vmatprep.subr.mxu0 0.0
        %889 = vmatpush1.msra.mxu0 0.0
        %890 = vmatprep.subr.mxu0 0.0
        %891 = vmatpush1.msra.mxu0 0.0
        %892 = vmatprep.subr.mxu0 0.0
        %893 = vmatpush1.msra.mxu0 0.0
        %894 = vmatprep.subr.mxu0 0.0
        %895 = vmatpush1.msra.mxu0 0.0
        %896 = vmatprep.subr.mxu0 0.0
        %897 = vmatpush1.msra.mxu0 0.0
        %898 = vmatprep.subr.mxu0 0.0
        %899 = vmatpush1.msra.mxu0 %v863
        %900 = vmatprep.subr.mxu0 0.0
        %901 = vmatpush1.msra.mxu0 %v862
        %902 = vmatprep.subr.mxu0 0.0
        %903 = vmatpush1.msra.mxu0 %v861
        %904 = vmatprep.subr.mxu0 0.0
        %905 = vmatpush1.msra.mxu0 %v860
        %906 = vmatprep.subr.mxu0 0.0
        %907 = vmatpush2.msra.mxu0 0.0
        %908 = vmatprep.subr.mxu0 0.0
        %909 = vmatpush2.msra.mxu0 0.0
        %910 = vmatprep.subr.mxu0 0.0
        %911 = vmatpush2.msra.mxu0 0.0
        %912 = vmatprep.subr.mxu0 0.0
        %913 = vmatpush2.msra.mxu0 0.0
        %914 = vmatprep.subr.mxu0 0.0
        %915 = vmatpush2.msra.mxu0 0.0
        %916 = vmatprep.subr.mxu0 0.0
        %917 = vmatpush2.msra.mxu0 0.0
        %918 = vmatprep.subr.mxu0 0.0
        %919 = vmatpush2.msra.mxu0 0.0
        %920 = vmatprep.subr.mxu0 0.0
        %921 = vmatpush2.msra.mxu0 0.0
        %922 = vmatprep.subr.mxu0 0.0
        %923 = vmatpush2.msra.mxu0 0.0
        %924 = vmatprep.subr.mxu0 0.0
        %925 = vmatpush2.msra.mxu0 0.0
        %926 = vmatprep.subr.mxu0 0.0
        %927 = vmatpush2.msra.mxu0 0.0
        %928 = vmatprep.subr.mxu0 0.0
        %929 = vmatpush2.msra.mxu0 0.0
        %930 = vmatprep.subr.mxu0 0.0
        %931 = vmatpush2.msra.mxu0 0.0
        %932 = vmatprep.subr.mxu0 0.0
        %933 = vmatpush2.msra.mxu0 0.0
        %934 = vmatprep.subr.mxu0 0.0
        %935 = vmatpush2.msra.mxu0 0.0
        %936 = vmatprep.subr.mxu0 0.0
        %937 = vmatpush2.msra.mxu0 0.0
        %938 = vmatprep.mubr.f32.mxu0 0.0
        %939 = vmatmul.mubr.f32.gmra.mxu0 %v872
        %v940 = vpop.f32.mrf.mxu0
        %v941 = vadd.f32 %v869, %v940
        %v942 = vpop.f32.mrf.mxu0
        %943 = vdwg.mxu0
        %vm944 = vcmask 64512
        %v946 = vsel %vm944, %v773, 0
        %v949 = vsel %vm944, %v857, 0
        %951 = vmatprep.subr.mxu0 0.0
        %952 = vmatpush1.xpose.msra.mxu0 0.0
        %953 = vmatprep.subr.mxu0 0.0
        %954 = vmatpush1.xpose.msra.mxu0 0.0
        %955 = vmatprep.subr.mxu0 0.0
        %956 = vmatpush1.xpose.msra.mxu0 0.0
        %957 = vmatprep.subr.mxu0 0.0
        %958 = vmatpush1.xpose.msra.mxu0 0.0
        %959 = vmatprep.subr.mxu0 0.0
        %960 = vmatpush1.xpose.msra.mxu0 0.0
        %961 = vmatprep.subr.mxu0 0.0
        %962 = vmatpush1.xpose.msra.mxu0 0.0
        %963 = vmatprep.subr.mxu0 0.0
        %964 = vmatpush1.xpose.msra.mxu0 0.0
        %965 = vmatprep.subr.mxu0 0.0
        %966 = vmatpush1.xpose.msra.mxu0 0.0
        %967 = vmatprep.subr.mxu0 0.0
        %968 = vmatpush1.xpose.msra.mxu0 0.0
        %969 = vmatprep.subr.mxu0 0.0
        %970 = vmatpush1.xpose.msra.mxu0 0.0
        %971 = vmatprep.subr.mxu0 0.0
        %972 = vmatpush1.xpose.msra.mxu0 0.0
        %973 = vmatprep.subr.mxu0 0.0
        %974 = vmatpush1.xpose.msra.mxu0 0.0
        %975 = vmatprep.subr.mxu0 0.0
        %976 = vmatpush1.xpose.msra.mxu0 0.0
        %977 = vmatprep.subr.mxu0 0.0
        %978 = vmatpush1.xpose.msra.mxu0 0.0
        %979 = vmatprep.subr.mxu0 0.0
        %980 = vmatpush1.xpose.msra.mxu0 0.0
        %981 = vmatprep.subr.mxu0 0.0
        %982 = vmatpush1.xpose.msra.mxu0 %v949
        %983 = vmatprep.subr.mxu0 0.0
        %984 = vmatpush2.xpose.msra.mxu0 0.0
        %985 = vmatprep.subr.mxu0 0.0
        %986 = vmatpush2.xpose.msra.mxu0 0.0
        %987 = vmatprep.subr.mxu0 0.0
        %988 = vmatpush2.xpose.msra.mxu0 0.0
        %989 = vmatprep.subr.mxu0 0.0
        %990 = vmatpush2.xpose.msra.mxu0 0.0
        %991 = vmatprep.subr.mxu0 0.0
        %992 = vmatpush2.xpose.msra.mxu0 0.0
        %993 = vmatprep.subr.mxu0 0.0
        %994 = vmatpush2.xpose.msra.mxu0 0.0
        %995 = vmatprep.subr.mxu0 0.0
        %996 = vmatpush2.xpose.msra.mxu0 0.0
        %997 = vmatprep.subr.mxu0 0.0
        %998 = vmatpush2.xpose.msra.mxu0 0.0
        %999 = vmatprep.subr.mxu0 0.0
        %1000 = vmatpush2.xpose.msra.mxu0 0.0
        %1001 = vmatprep.subr.mxu0 0.0
        %1002 = vmatpush2.xpose.msra.mxu0 0.0
        %1003 = vmatprep.subr.mxu0 0.0
        %1004 = vmatpush2.xpose.msra.mxu0 0.0
        %1005 = vmatprep.subr.mxu0 0.0
        %1006 = vmatpush2.xpose.msra.mxu0 0.0
        %1007 = vmatprep.subr.mxu0 0.0
        %1008 = vmatpush2.xpose.msra.mxu0 0.0
        %1009 = vmatprep.subr.mxu0 0.0
        %1010 = vmatpush2.xpose.msra.mxu0 0.0
        %1011 = vmatprep.subr.mxu0 0.0
        %1012 = vmatpush2.xpose.msra.mxu0 0.0
        %1013 = vmatprep.subr.mxu0 0.0
        %1014 = vmatpush2.xpose.msra.mxu0 0.0
        %1015 = vmatprep.mubr.f32.mxu0 0.0
        %1016 = vmatmul.mubr.f32.gmra.mxu0 %v946
        %v1017 = vpop.f32.mrf.mxu0
        %v1018 = vadd.f32 0.0, %v1017
        %v1019 = vpop.f32.mrf.mxu0
        %1020 = vdwg.mxu0
        %v1021 = vmul.f32 %v1018, 0.35355338
        %v1022 = vadd.f32 %v1021, %v690
        %v1023 = vsel %vm944, %v1022, -inf
        %1024 = vmax.xlane.f32.xlu0 %v1023
        %v1025 = vpop.xlane.xlu0 %1024
        %v1026 = vsub.f32 %v1022, %v1025
        %v1027 = vmul.f32 %v1026, 1.442695
        %v1028 = vpow.pop %v1027
        %v1029 = vsel %vm944, %v1028, 0.0
        %1030 = vadd.xlane.f32.xlu0 %v1029
        %v1031 = vpop.xlane.xlu0 %1030
        %v1032 = vrcp.pop %v1031
        %v1033 = vmul.f32 %v1028, %v1032
        %v1035 = vsel %vm944, %v1033, 0
        %1037 = vmatprep.subr.mxu0 0.0
        %1038 = vmatpush1.msra.mxu0 0.0
        %1039 = vmatprep.subr.mxu0 0.0
        %1040 = vmatpush1.msra.mxu0 0.0
        %1041 = vmatprep.subr.mxu0 0.0
        %1042 = vmatpush1.msra.mxu0 0.0
        %1043 = vmatprep.subr.mxu0 0.0
        %1044 = vmatpush1.msra.mxu0 0.0
        %1045 = vmatprep.subr.mxu0 0.0
        %1046 = vmatpush1.msra.mxu0 0.0
        %1047 = vmatprep.subr.mxu0 0.0
        %1048 = vmatpush1.msra.mxu0 0.0
        %1049 = vmatprep.subr.mxu0 0.0
        %1050 = vmatpush1.msra.mxu0 0.0
        %1051 = vmatprep.subr.mxu0 0.0
        %1052 = vmatpush1.msra.mxu0 0.0
        %1053 = vmatprep.subr.mxu0 0.0
        %1054 = vmatpush1.msra.mxu0 0.0
        %1055 = vmatprep.subr.mxu0 0.0
        %1056 = vmatpush1.msra.mxu0 0.0
        %1057 = vmatprep.subr.mxu0 0.0
        %1058 = vmatpush1.msra.mxu0 0.0
        %1059 = vmatprep.subr.mxu0 0.0
        %1060 = vmatpush1.msra.mxu0 0.0
        %1061 = vmatprep.subr.mxu0 0.0
        %1062 = vmatpush1.msra.mxu0 0.0
        %1063 = vmatprep.subr.mxu0 0.0
        %1064 = vmatpush1.msra.mxu0 0.0
        %1065 = vmatprep.subr.mxu0 0.0
        %1066 = vmatpush1.msra.mxu0 0.0
        %1067 = vmatprep.subr.mxu0 0.0
        %1068 = vmatpush1.msra.mxu0 %v941
        %1069 = vmatprep.subr.mxu0 0.0
        %1070 = vmatpush2.msra.mxu0 0.0
        %1071 = vmatprep.subr.mxu0 0.0
        %1072 = vmatpush2.msra.mxu0 0.0
        %1073 = vmatprep.subr.mxu0 0.0
        %1074 = vmatpush2.msra.mxu0 0.0
        %1075 = vmatprep.subr.mxu0 0.0
        %1076 = vmatpush2.msra.mxu0 0.0
        %1077 = vmatprep.subr.mxu0 0.0
        %1078 = vmatpush2.msra.mxu0 0.0
        %1079 = vmatprep.subr.mxu0 0.0
        %1080 = vmatpush2.msra.mxu0 0.0
        %1081 = vmatprep.subr.mxu0 0.0
        %1082 = vmatpush2.msra.mxu0 0.0
        %1083 = vmatprep.subr.mxu0 0.0
        %1084 = vmatpush2.msra.mxu0 0.0
        %1085 = vmatprep.subr.mxu0 0.0
        %1086 = vmatpush2.msra.mxu0 0.0
        %1087 = vmatprep.subr.mxu0 0.0
        %1088 = vmatpush2.msra.mxu0 0.0
        %1089 = vmatprep.subr.mxu0 0.0
        %1090 = vmatpush2.msra.mxu0 0.0
        %1091 = vmatprep.subr.mxu0 0.0
        %1092 = vmatpush2.msra.mxu0 0.0
        %1093 = vmatprep.subr.mxu0 0.0
        %1094 = vmatpush2.msra.mxu0 0.0
        %1095 = vmatprep.subr.mxu0 0.0
        %1096 = vmatpush2.msra.mxu0 0.0
        %1097 = vmatprep.subr.mxu0 0.0
        %1098 = vmatpush2.msra.mxu0 0.0
        %1099 = vmatprep.subr.mxu0 0.0
        %1100 = vmatpush2.msra.mxu0 0.0
        %1101 = vmatprep.mubr.f32.mxu0 0.0
        %1102 = vmatmul.mubr.f32.gmra.mxu0 %v1035
        %v1103 = vpop.f32.mrf.mxu0
        %v1104 = vadd.f32 0.0, %v1103
        %v1105 = vpop.f32.mrf.mxu0
        %1106 = vdwg.mxu0
        %1107 = vrot.lane.b32.xlu0 %v773, 120
        %v1108 = vpop.permute.xlu0 %1107
        %1109 = vrot.lane.b32.xlu0 %v857, 120
        %v1110 = vpop.permute.xlu0 %1109
        %v1111 = vsel %vm944, %v1108, 0
        %v1113 = vsel %vm944, %v1110, 0
        %1115 = vmatprep.subr.mxu0 0.0
        %1116 = vmatpush1.xpose.msra.mxu0 0.0
        %1117 = vmatprep.subr.mxu0 0.0
        %1118 = vmatpush1.xpose.msra.mxu0 0.0
        %1119 = vmatprep.subr.mxu0 0.0
        %1120 = vmatpush1.xpose.msra.mxu0 0.0
        %1121 = vmatprep.subr.mxu0 0.0
        %1122 = vmatpush1.xpose.msra.mxu0 0.0
        %1123 = vmatprep.subr.mxu0 0.0
        %1124 = vmatpush1.xpose.msra.mxu0 0.0
        %1125 = vmatprep.subr.mxu0 0.0
        %1126 = vmatpush1.xpose.msra.mxu0 0.0
        %1127 = vmatprep.subr.mxu0 0.0
        %1128 = vmatpush1.xpose.msra.mxu0 0.0
        %1129 = vmatprep.subr.mxu0 0.0
        %1130 = vmatpush1.xpose.msra.mxu0 0.0
        %1131 = vmatprep.subr.mxu0 0.0
        %1132 = vmatpush1.xpose.msra.mxu0 0.0
        %1133 = vmatprep.subr.mxu0 0.0
        %1134 = vmatpush1.xpose.msra.mxu0 0.0
        %1135 = vmatprep.subr.mxu0 0.0
        %1136 = vmatpush1.xpose.msra.mxu0 0.0
        %1137 = vmatprep.subr.mxu0 0.0
        %1138 = vmatpush1.xpose.msra.mxu0 0.0
        %1139 = vmatprep.subr.mxu0 0.0
        %1140 = vmatpush1.xpose.msra.mxu0 0.0
        %1141 = vmatprep.subr.mxu0 0.0
        %1142 = vmatpush1.xpose.msra.mxu0 0.0
        %1143 = vmatprep.subr.mxu0 0.0
        %1144 = vmatpush1.xpose.msra.mxu0 0.0
        %1145 = vmatprep.subr.mxu0 0.0
        %1146 = vmatpush1.xpose.msra.mxu0 %v1113
        %1147 = vmatprep.subr.mxu0 0.0
        %1148 = vmatpush2.xpose.msra.mxu0 0.0
        %1149 = vmatprep.subr.mxu0 0.0
        %1150 = vmatpush2.xpose.msra.mxu0 0.0
        %1151 = vmatprep.subr.mxu0 0.0
        %1152 = vmatpush2.xpose.msra.mxu0 0.0
        %1153 = vmatprep.subr.mxu0 0.0
        %1154 = vmatpush2.xpose.msra.mxu0 0.0
        %1155 = vmatprep.subr.mxu0 0.0
        %1156 = vmatpush2.xpose.msra.mxu0 0.0
        %1157 = vmatprep.subr.mxu0 0.0
        %1158 = vmatpush2.xpose.msra.mxu0 0.0
        %1159 = vmatprep.subr.mxu0 0.0
        %1160 = vmatpush2.xpose.msra.mxu0 0.0
        %1161 = vmatprep.subr.mxu0 0.0
        %1162 = vmatpush2.xpose.msra.mxu0 0.0
        %1163 = vmatprep.subr.mxu0 0.0
        %1164 = vmatpush2.xpose.msra.mxu0 0.0
        %1165 = vmatprep.subr.mxu0 0.0
        %1166 = vmatpush2.xpose.msra.mxu0 0.0
        %1167 = vmatprep.subr.mxu0 0.0
        %1168 = vmatpush2.xpose.msra.mxu0 0.0
        %1169 = vmatprep.subr.mxu0 0.0
        %1170 = vmatpush2.xpose.msra.mxu0 0.0
        %1171 = vmatprep.subr.mxu0 0.0
        %1172 = vmatpush2.xpose.msra.mxu0 0.0
        %1173 = vmatprep.subr.mxu0 0.0
        %1174 = vmatpush2.xpose.msra.mxu0 0.0
        %1175 = vmatprep.subr.mxu0 0.0
        %1176 = vmatpush2.xpose.msra.mxu0 0.0
        %1177 = vmatprep.subr.mxu0 0.0
        %1178 = vmatpush2.xpose.msra.mxu0 0.0
        %1179 = vmatprep.mubr.f32.mxu0 0.0
        %1180 = vmatmul.mubr.f32.gmra.mxu0 %v1111
        %v1181 = vpop.f32.mrf.mxu0
        %v1182 = vadd.f32 0.0, %v1181
        %v1183 = vpop.f32.mrf.mxu0
        %1184 = vdwg.mxu0
        %v1185 = vmul.f32 %v1182, 0.35355338
        %v1186 = vadd.f32 %v1185, %v690
        %v1187 = vsel %vm944, %v1186, -inf
        %1188 = vmax.xlane.f32.xlu0 %v1187
        %v1189 = vpop.xlane.xlu0 %1188
        %v1190 = vsub.f32 %v1186, %v1189
        %v1191 = vmul.f32 %v1190, 1.442695
        %v1192 = vpow.pop %v1191
        %v1193 = vsel %vm944, %v1192, 0.0
        %1194 = vadd.xlane.f32.xlu0 %v1193
        %v1195 = vpop.xlane.xlu0 %1194
        %v1196 = vrcp.pop %v1195
        %v1197 = vmul.f32 %v1192, %v1196
        %1199 = vrot.lane.b32.xlu0 %v941, 120
        %v1200 = vpop.permute.xlu0 %1199
        %v1203 = vsel %vm944, %v1197, 0
        %1205 = vmatprep.subr.mxu0 0.0
        %1206 = vmatpush1.msra.mxu0 0.0
        %1207 = vmatprep.subr.mxu0 0.0
        %1208 = vmatpush1.msra.mxu0 0.0
        %1209 = vmatprep.subr.mxu0 0.0
        %1210 = vmatpush1.msra.mxu0 0.0
        %1211 = vmatprep.subr.mxu0 0.0
        %1212 = vmatpush1.msra.mxu0 0.0
        %1213 = vmatprep.subr.mxu0 0.0
        %1214 = vmatpush1.msra.mxu0 0.0
        %1215 = vmatprep.subr.mxu0 0.0
        %1216 = vmatpush1.msra.mxu0 0.0
        %1217 = vmatprep.subr.mxu0 0.0
        %1218 = vmatpush1.msra.mxu0 0.0
        %1219 = vmatprep.subr.mxu0 0.0
        %1220 = vmatpush1.msra.mxu0 0.0
        %1221 = vmatprep.subr.mxu0 0.0
        %1222 = vmatpush1.msra.mxu0 0.0
        %1223 = vmatprep.subr.mxu0 0.0
        %1224 = vmatpush1.msra.mxu0 0.0
        %1225 = vmatprep.subr.mxu0 0.0
        %1226 = vmatpush1.msra.mxu0 0.0
        %1227 = vmatprep.subr.mxu0 0.0
        %1228 = vmatpush1.msra.mxu0 0.0
        %1229 = vmatprep.subr.mxu0 0.0
        %1230 = vmatpush1.msra.mxu0 0.0
        %1231 = vmatprep.subr.mxu0 0.0
        %1232 = vmatpush1.msra.mxu0 0.0
        %1233 = vmatprep.subr.mxu0 0.0
        %1234 = vmatpush1.msra.mxu0 0.0
        %1235 = vmatprep.subr.mxu0 0.0
        %1236 = vmatpush1.msra.mxu0 %v1200
        %1237 = vmatprep.subr.mxu0 0.0
        %1238 = vmatpush2.msra.mxu0 0.0
        %1239 = vmatprep.subr.mxu0 0.0
        %1240 = vmatpush2.msra.mxu0 0.0
        %1241 = vmatprep.subr.mxu0 0.0
        %1242 = vmatpush2.msra.mxu0 0.0
        %1243 = vmatprep.subr.mxu0 0.0
        %1244 = vmatpush2.msra.mxu0 0.0
        %1245 = vmatprep.subr.mxu0 0.0
        %1246 = vmatpush2.msra.mxu0 0.0
        %1247 = vmatprep.subr.mxu0 0.0
        %1248 = vmatpush2.msra.mxu0 0.0
        %1249 = vmatprep.subr.mxu0 0.0
        %1250 = vmatpush2.msra.mxu0 0.0
        %1251 = vmatprep.subr.mxu0 0.0
        %1252 = vmatpush2.msra.mxu0 0.0
        %1253 = vmatprep.subr.mxu0 0.0
        %1254 = vmatpush2.msra.mxu0 0.0
        %1255 = vmatprep.subr.mxu0 0.0
        %1256 = vmatpush2.msra.mxu0 0.0
        %1257 = vmatprep.subr.mxu0 0.0
        %1258 = vmatpush2.msra.mxu0 0.0
        %1259 = vmatprep.subr.mxu0 0.0
        %1260 = vmatpush2.msra.mxu0 0.0
        %1261 = vmatprep.subr.mxu0 0.0
        %1262 = vmatpush2.msra.mxu0 0.0
        %1263 = vmatprep.subr.mxu0 0.0
        %1264 = vmatpush2.msra.mxu0 0.0
        %1265 = vmatprep.subr.mxu0 0.0
        %1266 = vmatpush2.msra.mxu0 0.0
        %1267 = vmatprep.subr.mxu0 0.0
        %1268 = vmatpush2.msra.mxu0 0.0
        %1269 = vmatprep.mubr.f32.mxu0 0.0
        %1270 = vmatmul.mubr.f32.gmra.mxu0 %v1203
        %v1271 = vpop.f32.mrf.mxu0
        %v1272 = vadd.f32 0.0, %v1271
        %v1273 = vpop.f32.mrf.mxu0
        %1274 = vdwg.mxu0
        %1275 = vrot.lane.b32.xlu0 %v773, 112
        %v1276 = vpop.permute.xlu0 %1275
        %1277 = vrot.lane.b32.xlu0 %v857, 112
        %v1278 = vpop.permute.xlu0 %1277
        %v1279 = vsel %vm944, %v1276, 0
        %v1281 = vsel %vm944, %v1278, 0
        %1283 = vmatprep.subr.mxu0 0.0
        %1284 = vmatpush1.xpose.msra.mxu0 0.0
        %1285 = vmatprep.subr.mxu0 0.0
        %1286 = vmatpush1.xpose.msra.mxu0 0.0
        %1287 = vmatprep.subr.mxu0 0.0
        %1288 = vmatpush1.xpose.msra.mxu0 0.0
        %1289 = vmatprep.subr.mxu0 0.0
        %1290 = vmatpush1.xpose.msra.mxu0 0.0
        %1291 = vmatprep.subr.mxu0 0.0
        %1292 = vmatpush1.xpose.msra.mxu0 0.0
        %1293 = vmatprep.subr.mxu0 0.0
        %1294 = vmatpush1.xpose.msra.mxu0 0.0
        %1295 = vmatprep.subr.mxu0 0.0
        %1296 = vmatpush1.xpose.msra.mxu0 0.0
        %1297 = vmatprep.subr.mxu0 0.0
        %1298 = vmatpush1.xpose.msra.mxu0 0.0
        %1299 = vmatprep.subr.mxu0 0.0
        %1300 = vmatpush1.xpose.msra.mxu0 0.0
        %1301 = vmatprep.subr.mxu0 0.0
        %1302 = vmatpush1.xpose.msra.mxu0 0.0
        %1303 = vmatprep.subr.mxu0 0.0
        %1304 = vmatpush1.xpose.msra.mxu0 0.0
        %1305 = vmatprep.subr.mxu0 0.0
        %1306 = vmatpush1.xpose.msra.mxu0 0.0
        %1307 = vmatprep.subr.mxu0 0.0
        %1308 = vmatpush1.xpose.msra.mxu0 0.0
        %1309 = vmatprep.subr.mxu0 0.0
        %1310 = vmatpush1.xpose.msra.mxu0 0.0
        %1311 = vmatprep.subr.mxu0 0.0
        %1312 = vmatpush1.xpose.msra.mxu0 0.0
        %1313 = vmatprep.subr.mxu0 0.0
        %1314 = vmatpush1.xpose.msra.mxu0 %v1281
        %1315 = vmatprep.subr.mxu0 0.0
        %1316 = vmatpush2.xpose.msra.mxu0 0.0
        %1317 = vmatprep.subr.mxu0 0.0
        %1318 = vmatpush2.xpose.msra.mxu0 0.0
        %1319 = vmatprep.subr.mxu0 0.0
        %1320 = vmatpush2.xpose.msra.mxu0 0.0
        %1321 = vmatprep.subr.mxu0 0.0
        %1322 = vmatpush2.xpose.msra.mxu0 0.0
        %1323 = vmatprep.subr.mxu0 0.0
        %1324 = vmatpush2.xpose.msra.mxu0 0.0
        %1325 = vmatprep.subr.mxu0 0.0
        %1326 = vmatpush2.xpose.msra.mxu0 0.0
        %1327 = vmatprep.subr.mxu0 0.0
        %1328 = vmatpush2.xpose.msra.mxu0 0.0
        %1329 = vmatprep.subr.mxu0 0.0
        %1330 = vmatpush2.xpose.msra.mxu0 0.0
        %1331 = vmatprep.subr.mxu0 0.0
        %1332 = vmatpush2.xpose.msra.mxu0 0.0
        %1333 = vmatprep.subr.mxu0 0.0
        %1334 = vmatpush2.xpose.msra.mxu0 0.0
        %1335 = vmatprep.subr.mxu0 0.0
        %1336 = vmatpush2.xpose.msra.mxu0 0.0
        %1337 = vmatprep.subr.mxu0 0.0
        %1338 = vmatpush2.xpose.msra.mxu0 0.0
        %1339 = vmatprep.subr.mxu0 0.0
        %1340 = vmatpush2.xpose.msra.mxu0 0.0
        %1341 = vmatprep.subr.mxu0 0.0
        %1342 = vmatpush2.xpose.msra.mxu0 0.0
        %1343 = vmatprep.subr.mxu0 0.0
        %1344 = vmatpush2.xpose.msra.mxu0 0.0
        %1345 = vmatprep.subr.mxu0 0.0
        %1346 = vmatpush2.xpose.msra.mxu0 0.0
        %1347 = vmatprep.mubr.f32.mxu0 0.0
        %1348 = vmatmul.mubr.f32.gmra.mxu0 %v1279
        %v1349 = vpop.f32.mrf.mxu0
        %v1350 = vadd.f32 0.0, %v1349
        %v1351 = vpop.f32.mrf.mxu0
        %1352 = vdwg.mxu0
        %v1353 = vmul.f32 %v1350, 0.35355338
        %v1354 = vadd.f32 %v1353, %v690
        %v1355 = vsel %vm944, %v1354, -inf
        %1356 = vmax.xlane.f32.xlu0 %v1355
        %v1357 = vpop.xlane.xlu0 %1356
        %v1358 = vsub.f32 %v1354, %v1357
        %v1359 = vmul.f32 %v1358, 1.442695
        %v1360 = vpow.pop %v1359
        %v1361 = vsel %vm944, %v1360, 0.0
        %1362 = vadd.xlane.f32.xlu0 %v1361
        %v1363 = vpop.xlane.xlu0 %1362
        %v1364 = vrcp.pop %v1363
        %v1365 = vmul.f32 %v1360, %v1364
        %1366 = vrot.lane.b32.xlu0 %v941, 112
        %v1367 = vpop.permute.xlu0 %1366
        %v1370 = vsel %vm944, %v1365, 0
        %1372 = vmatprep.subr.mxu0 0.0
        %1373 = vmatpush1.msra.mxu0 0.0
        %1374 = vmatprep.subr.mxu0 0.0
        %1375 = vmatpush1.msra.mxu0 0.0
        %1376 = vmatprep.subr.mxu0 0.0
        %1377 = vmatpush1.msra.mxu0 0.0
        %1378 = vmatprep.subr.mxu0 0.0
        %1379 = vmatpush1.msra.mxu0 0.0
        %1380 = vmatprep.subr.mxu0 0.0
        %1381 = vmatpush1.msra.mxu0 0.0
        %1382 = vmatprep.subr.mxu0 0.0
        %1383 = vmatpush1.msra.mxu0 0.0
        %1384 = vmatprep.subr.mxu0 0.0
        %1385 = vmatpush1.msra.mxu0 0.0
        %1386 = vmatprep.subr.mxu0 0.0
        %1387 = vmatpush1.msra.mxu0 0.0
        %1388 = vmatprep.subr.mxu0 0.0
        %1389 = vmatpush1.msra.mxu0 0.0
        %1390 = vmatprep.subr.mxu0 0.0
        %1391 = vmatpush1.msra.mxu0 0.0
        %1392 = vmatprep.subr.mxu0 0.0
        %1393 = vmatpush1.msra.mxu0 0.0
        %1394 = vmatprep.subr.mxu0 0.0
        %1395 = vmatpush1.msra.mxu0 0.0
        %1396 = vmatprep.subr.mxu0 0.0
        %1397 = vmatpush1.msra.mxu0 0.0
        %1398 = vmatprep.subr.mxu0 0.0
        %1399 = vmatpush1.msra.mxu0 0.0
        %1400 = vmatprep.subr.mxu0 0.0
        %1401 = vmatpush1.msra.mxu0 0.0
        %1402 = vmatprep.subr.mxu0 0.0
        %1403 = vmatpush1.msra.mxu0 %v1367
        %1404 = vmatprep.subr.mxu0 0.0
        %1405 = vmatpush2.msra.mxu0 0.0
        %1406 = vmatprep.subr.mxu0 0.0
        %1407 = vmatpush2.msra.mxu0 0.0
        %1408 = vmatprep.subr.mxu0 0.0
        %1409 = vmatpush2.msra.mxu0 0.0
        %1410 = vmatprep.subr.mxu0 0.0
        %1411 = vmatpush2.msra.mxu0 0.0
        %1412 = vmatprep.subr.mxu0 0.0
        %1413 = vmatpush2.msra.mxu0 0.0
        %1414 = vmatprep.subr.mxu0 0.0
        %1415 = vmatpush2.msra.mxu0 0.0
        %1416 = vmatprep.subr.mxu0 0.0
        %1417 = vmatpush2.msra.mxu0 0.0
        %1418 = vmatprep.subr.mxu0 0.0
        %1419 = vmatpush2.msra.mxu0 0.0
        %1420 = vmatprep.subr.mxu0 0.0
        %1421 = vmatpush2.msra.mxu0 0.0
        %1422 = vmatprep.subr.mxu0 0.0
        %1423 = vmatpush2.msra.mxu0 0.0
        %1424 = vmatprep.subr.mxu0 0.0
        %1425 = vmatpush2.msra.mxu0 0.0
        %1426 = vmatprep.subr.mxu0 0.0
        %1427 = vmatpush2.msra.mxu0 0.0
        %1428 = vmatprep.subr.mxu0 0.0
        %1429 = vmatpush2.msra.mxu0 0.0
        %1430 = vmatprep.subr.mxu0 0.0
        %1431 = vmatpush2.msra.mxu0 0.0
        %1432 = vmatprep.subr.mxu0 0.0
        %1433 = vmatpush2.msra.mxu0 0.0
        %1434 = vmatprep.subr.mxu0 0.0
        %1435 = vmatpush2.msra.mxu0 0.0
        %1436 = vmatprep.mubr.f32.mxu0 0.0
        %1437 = vmatmul.mubr.f32.gmra.mxu0 %v1370
        %v1438 = vpop.f32.mrf.mxu0
        %v1439 = vadd.f32 0.0, %v1438
        %v1440 = vpop.f32.mrf.mxu0
        %1441 = vdwg.mxu0
        %1442 = vrot.lane.b32.xlu0 %v773, 104
        %v1443 = vpop.permute.xlu0 %1442
        %1444 = vrot.lane.b32.xlu0 %v857, 104
        %v1445 = vpop.permute.xlu0 %1444
        %v1446 = vsel %vm944, %v1443, 0
        %v1448 = vsel %vm944, %v1445, 0
        %1450 = vmatprep.subr.mxu0 0.0
        %1451 = vmatpush1.xpose.msra.mxu0 0.0
        %1452 = vmatprep.subr.mxu0 0.0
        %1453 = vmatpush1.xpose.msra.mxu0 0.0
        %1454 = vmatprep.subr.mxu0 0.0
        %1455 = vmatpush1.xpose.msra.mxu0 0.0
        %1456 = vmatprep.subr.mxu0 0.0
        %1457 = vmatpush1.xpose.msra.mxu0 0.0
        %1458 = vmatprep.subr.mxu0 0.0
        %1459 = vmatpush1.xpose.msra.mxu0 0.0
        %1460 = vmatprep.subr.mxu0 0.0
        %1461 = vmatpush1.xpose.msra.mxu0 0.0
        %1462 = vmatprep.subr.mxu0 0.0
        %1463 = vmatpush1.xpose.msra.mxu0 0.0
        %1464 = vmatprep.subr.mxu0 0.0
        %1465 = vmatpush1.xpose.msra.mxu0 0.0
        %1466 = vmatprep.subr.mxu0 0.0
        %1467 = vmatpush1.xpose.msra.mxu0 0.0
        %1468 = vmatprep.subr.mxu0 0.0
        %1469 = vmatpush1.xpose.msra.mxu0 0.0
        %1470 = vmatprep.subr.mxu0 0.0
        %1471 = vmatpush1.xpose.msra.mxu0 0.0
        %1472 = vmatprep.subr.mxu0 0.0
        %1473 = vmatpush1.xpose.msra.mxu0 0.0
        %1474 = vmatprep.subr.mxu0 0.0
        %1475 = vmatpush1.xpose.msra.mxu0 0.0
        %1476 = vmatprep.subr.mxu0 0.0
        %1477 = vmatpush1.xpose.msra.mxu0 0.0
        %1478 = vmatprep.subr.mxu0 0.0
        %1479 = vmatpush1.xpose.msra.mxu0 0.0
        %1480 = vmatprep.subr.mxu0 0.0
        %1481 = vmatpush1.xpose.msra.mxu0 %v1448
        %1482 = vmatprep.subr.mxu0 0.0
        %1483 = vmatpush2.xpose.msra.mxu0 0.0
        %1484 = vmatprep.subr.mxu0 0.0
        %1485 = vmatpush2.xpose.msra.mxu0 0.0
        %1486 = vmatprep.subr.mxu0 0.0
        %1487 = vmatpush2.xpose.msra.mxu0 0.0
        %1488 = vmatprep.subr.mxu0 0.0
        %1489 = vmatpush2.xpose.msra.mxu0 0.0
        %1490 = vmatprep.subr.mxu0 0.0
        %1491 = vmatpush2.xpose.msra.mxu0 0.0
        %1492 = vmatprep.subr.mxu0 0.0
        %1493 = vmatpush2.xpose.msra.mxu0 0.0
        %1494 = vmatprep.subr.mxu0 0.0
        %1495 = vmatpush2.xpose.msra.mxu0 0.0
        %1496 = vmatprep.subr.mxu0 0.0
        %1497 = vmatpush2.xpose.msra.mxu0 0.0
        %1498 = vmatprep.subr.mxu0 0.0
        %1499 = vmatpush2.xpose.msra.mxu0 0.0
        %1500 = vmatprep.subr.mxu0 0.0
        %1501 = vmatpush2.xpose.msra.mxu0 0.0
        %1502 = vmatprep.subr.mxu0 0.0
        %1503 = vmatpush2.xpose.msra.mxu0 0.0
        %1504 = vmatprep.subr.mxu0 0.0
        %1505 = vmatpush2.xpose.msra.mxu0 0.0
        %1506 = vmatprep.subr.mxu0 0.0
        %1507 = vmatpush2.xpose.msra.mxu0 0.0
        %1508 = vmatprep.subr.mxu0 0.0
        %1509 = vmatpush2.xpose.msra.mxu0 0.0
        %1510 = vmatprep.subr.mxu0 0.0
        %1511 = vmatpush2.xpose.msra.mxu0 0.0
        %1512 = vmatprep.subr.mxu0 0.0
        %1513 = vmatpush2.xpose.msra.mxu0 0.0
        %1514 = vmatprep.mubr.f32.mxu0 0.0
        %1515 = vmatmul.mubr.f32.gmra.mxu0 %v1446
        %v1516 = vpop.f32.mrf.mxu0
        %v1517 = vadd.f32 0.0, %v1516
        %v1518 = vpop.f32.mrf.mxu0
        %1519 = vdwg.mxu0
        %v1520 = vmul.f32 %v1517, 0.35355338
        %v1521 = vadd.f32 %v1520, %v690
        %v1522 = vsel %vm944, %v1521, -inf
        %1523 = vmax.xlane.f32.xlu0 %v1522
        %v1524 = vpop.xlane.xlu0 %1523
        %v1525 = vsub.f32 %v1521, %v1524
        %v1526 = vmul.f32 %v1525, 1.442695
        %v1527 = vpow.pop %v1526
        %v1528 = vsel %vm944, %v1527, 0.0
        %1529 = vadd.xlane.f32.xlu0 %v1528
        %v1530 = vpop.xlane.xlu0 %1529
        %v1531 = vrcp.pop %v1530
        %v1532 = vmul.f32 %v1527, %v1531
        %1533 = vrot.lane.b32.xlu0 %v941, 104
        %v1534 = vpop.permute.xlu0 %1533
        %v1537 = vsel %vm944, %v1532, 0
        %1539 = vmatprep.subr.mxu0 0.0
        %1540 = vmatpush1.msra.mxu0 0.0
        %1541 = vmatprep.subr.mxu0 0.0
        %1542 = vmatpush1.msra.mxu0 0.0
        %1543 = vmatprep.subr.mxu0 0.0
        %1544 = vmatpush1.msra.mxu0 0.0
        %1545 = vmatprep.subr.mxu0 0.0
        %1546 = vmatpush1.msra.mxu0 0.0
        %1547 = vmatprep.subr.mxu0 0.0
        %1548 = vmatpush1.msra.mxu0 0.0
        %1549 = vmatprep.subr.mxu0 0.0
        %1550 = vmatpush1.msra.mxu0 0.0
        %1551 = vmatprep.subr.mxu0 0.0
        %1552 = vmatpush1.msra.mxu0 0.0
        %1553 = vmatprep.subr.mxu0 0.0
        %1554 = vmatpush1.msra.mxu0 0.0
        %1555 = vmatprep.subr.mxu0 0.0
        %1556 = vmatpush1.msra.mxu0 0.0
        %1557 = vmatprep.subr.mxu0 0.0
        %1558 = vmatpush1.msra.mxu0 0.0
        %1559 = vmatprep.subr.mxu0 0.0
        %1560 = vmatpush1.msra.mxu0 0.0
        %1561 = vmatprep.subr.mxu0 0.0
        %1562 = vmatpush1.msra.mxu0 0.0
        %1563 = vmatprep.subr.mxu0 0.0
        %1564 = vmatpush1.msra.mxu0 0.0
        %1565 = vmatprep.subr.mxu0 0.0
        %1566 = vmatpush1.msra.mxu0 0.0
        %1567 = vmatprep.subr.mxu0 0.0
        %1568 = vmatpush1.msra.mxu0 0.0
        %1569 = vmatprep.subr.mxu0 0.0
        %1570 = vmatpush1.msra.mxu0 %v1534
        %1571 = vmatprep.subr.mxu0 0.0
        %1572 = vmatpush2.msra.mxu0 0.0
        %1573 = vmatprep.subr.mxu0 0.0
        %1574 = vmatpush2.msra.mxu0 0.0
        %1575 = vmatprep.subr.mxu0 0.0
        %1576 = vmatpush2.msra.mxu0 0.0
        %1577 = vmatprep.subr.mxu0 0.0
        %1578 = vmatpush2.msra.mxu0 0.0
        %1579 = vmatprep.subr.mxu0 0.0
        %1580 = vmatpush2.msra.mxu0 0.0
        %1581 = vmatprep.subr.mxu0 0.0
        %1582 = vmatpush2.msra.mxu0 0.0
        %1583 = vmatprep.subr.mxu0 0.0
        %1584 = vmatpush2.msra.mxu0 0.0
        %1585 = vmatprep.subr.mxu0 0.0
        %1586 = vmatpush2.msra.mxu0 0.0
        %1587 = vmatprep.subr.mxu0 0.0
        %1588 = vmatpush2.msra.mxu0 0.0
        %1589 = vmatprep.subr.mxu0 0.0
        %1590 = vmatpush2.msra.mxu0 0.0
        %1591 = vmatprep.subr.mxu0 0.0
        %1592 = vmatpush2.msra.mxu0 0.0
        %1593 = vmatprep.subr.mxu0 0.0
        %1594 = vmatpush2.msra.mxu0 0.0
        %1595 = vmatprep.subr.mxu0 0.0
        %1596 = vmatpush2.msra.mxu0 0.0
        %1597 = vmatprep.subr.mxu0 0.0
        %1598 = vmatpush2.msra.mxu0 0.0
        %1599 = vmatprep.subr.mxu0 0.0
        %1600 = vmatpush2.msra.mxu0 0.0
        %1601 = vmatprep.subr.mxu0 0.0
        %1602 = vmatpush2.msra.mxu0 0.0
        %1603 = vmatprep.mubr.f32.mxu0 0.0
        %1604 = vmatmul.mubr.f32.gmra.mxu0 %v1537
        %v1605 = vpop.f32.mrf.mxu0
        %v1606 = vadd.f32 0.0, %v1605
        %v1607 = vpop.f32.mrf.mxu0
        %1608 = vdwg.mxu0
        %1610 = vrot.lane.b32.xlu0 %v1272, 8
        %v1611 = vpop.permute.xlu0 %1610
        %1614 = vrot.lane.b32.xlu0 %v1439, 16
        %v1615 = vpop.permute.xlu0 %1614
        %1618 = vrot.lane.b32.xlu0 %v1606, 24
        %v1619 = vpop.permute.xlu0 %1618
        %v1621 = vsel %vm944, %v1104, %v1611
        %vm1622 = vcmask 130048
        %v1623 = vsel %vm1622, %v1621, %v1615
        %vm1624 = vcmask 195584
        %v1625 = vsel %vm1624, %v1623, %v1619
        %1626 = vrot.lane.b32.xlu0 %v1197, 8
        %v1627 = vpop.permute.xlu0 %1626
        %1629 = vrot.lane.b32.xlu0 %v1365, 16
        %v1630 = vpop.permute.xlu0 %1629
        %1632 = vrot.lane.b32.xlu0 %v1532, 24
        %v1633 = vpop.permute.xlu0 %1632
        %v1635 = vsel %vm944, %v1033, %v1627
        %v1636 = vsel %vm1622, %v1635, %v1630
        %v1637 = vsel %vm1624, %v1636, %v1633
        %v1638 = vld [vmem:[#allocation14] sm:$0xff]
        %v1639 = vld [vmem:[#allocation14 + $0x8] sm:$0xff]
        %v1640 = vld [vmem:[#allocation14 + $0x10] sm:$0xff]
        %v1641 = vld [vmem:[#allocation14 + $0x18] sm:$0xff]
        %v1642 = vld [vmem:[%s11] sm:$0x1]
        %v1644 = vlaneseq
        %v1645 = vshrl.u32 %v1644, 7
        %v1646 = vsub.s32 0, %v1645
        %v1647 = vrot.slane %v1642, %v1646
        %v1650 = vsel %vm702, %v1625, 0
        %1652 = vmatprep.subr.mxu0 0.0
        %1653 = vmatpush1.msra.mxu0 0.0
        %1654 = vmatprep.subr.mxu0 0.0
        %1655 = vmatpush1.msra.mxu0 0.0
        %1656 = vmatprep.subr.mxu0 0.0
        %1657 = vmatpush1.msra.mxu0 0.0
        %1658 = vmatprep.subr.mxu0 0.0
        %1659 = vmatpush1.msra.mxu0 0.0
        %1660 = vmatprep.subr.mxu0 0.0
        %1661 = vmatpush1.msra.mxu0 0.0
        %1662 = vmatprep.subr.mxu0 0.0
        %1663 = vmatpush1.msra.mxu0 0.0
        %1664 = vmatprep.subr.mxu0 0.0
        %1665 = vmatpush1.msra.mxu0 0.0
        %1666 = vmatprep.subr.mxu0 0.0
        %1667 = vmatpush1.msra.mxu0 0.0
        %1668 = vmatprep.subr.mxu0 0.0
        %1669 = vmatpush1.msra.mxu0 0.0
        %1670 = vmatprep.subr.mxu0 0.0
        %1671 = vmatpush1.msra.mxu0 0.0
        %1672 = vmatprep.subr.mxu0 0.0
        %1673 = vmatpush1.msra.mxu0 0.0
        %1674 = vmatprep.subr.mxu0 0.0
        %1675 = vmatpush1.msra.mxu0 0.0
        %1676 = vmatprep.subr.mxu0 0.0
        %1677 = vmatpush1.msra.mxu0 %v1641
        %1678 = vmatprep.subr.mxu0 0.0
        %1679 = vmatpush1.msra.mxu0 %v1640
        %1680 = vmatprep.subr.mxu0 0.0
        %1681 = vmatpush1.msra.mxu0 %v1639
        %1682 = vmatprep.subr.mxu0 0.0
        %1683 = vmatpush1.msra.mxu0 %v1638
        %1684 = vmatprep.subr.mxu0 0.0
        %1685 = vmatpush2.msra.mxu0 0.0
        %1686 = vmatprep.subr.mxu0 0.0
        %1687 = vmatpush2.msra.mxu0 0.0
        %1688 = vmatprep.subr.mxu0 0.0
        %1689 = vmatpush2.msra.mxu0 0.0
        %1690 = vmatprep.subr.mxu0 0.0
        %1691 = vmatpush2.msra.mxu0 0.0
        %1692 = vmatprep.subr.mxu0 0.0
        %1693 = vmatpush2.msra.mxu0 0.0
        %1694 = vmatprep.subr.mxu0 0.0
        %1695 = vmatpush2.msra.mxu0 0.0
        %1696 = vmatprep.subr.mxu0 0.0
        %1697 = vmatpush2.msra.mxu0 0.0
        %1698 = vmatprep.subr.mxu0 0.0
        %1699 = vmatpush2.msra.mxu0 0.0
        %1700 = vmatprep.subr.mxu0 0.0
        %1701 = vmatpush2.msra.mxu0 0.0
        %1702 = vmatprep.subr.mxu0 0.0
        %1703 = vmatpush2.msra.mxu0 0.0
        %1704 = vmatprep.subr.mxu0 0.0
        %1705 = vmatpush2.msra.mxu0 0.0
        %1706 = vmatprep.subr.mxu0 0.0
        %1707 = vmatpush2.msra.mxu0 0.0
        %1708 = vmatprep.subr.mxu0 0.0
        %1709 = vmatpush2.msra.mxu0 0.0
        %1710 = vmatprep.subr.mxu0 0.0
        %1711 = vmatpush2.msra.mxu0 0.0
        %1712 = vmatprep.subr.mxu0 0.0
        %1713 = vmatpush2.msra.mxu0 0.0
        %1714 = vmatprep.subr.mxu0 0.0
        %1715 = vmatpush2.msra.mxu0 0.0
        %1716 = vmatprep.mubr.f32.mxu0 0.0
        %1717 = vmatmul.mubr.f32.gmra.mxu0 %v1650
        %v1718 = vpop.f32.mrf.mxu0
        %v1719 = vadd.f32 %v1647, %v1718
        %v1720 = vpop.f32.mrf.mxu0
        %1721 = vdwg.mxu0
        %v1722 = vadd.f32 %v1719, %v687
        %v1723 = vsel %vm702, %v1722, 0.0
        %1724 = vadd.xlane.f32.xlu0 %v1723
        %v1725 = vpop.xlane.xlu0 %1724
        %v1726 = vrcp.pop 32.0
        %v1727 = vmul.f32 %v1725, %v1726
        %v1728 = vsub.f32 %v1722, %v1727
        %v1729 = vmul.f32 %v1728, %v1728
        %v1730 = vsel %vm702, %v1729, 0.0
        %1731 = vadd.xlane.f32.xlu0 %v1730
        %v1732 = vpop.xlane.xlu0 %1731
        %v1733 = vmul.f32 %v1732, %v1726
        %v1734 = vadd.f32 %v1733, 1e-05
        %v1735 = vrsqrt.pop %v1734
        %v1736 = vmul.f32 %v1728, %v1735
        %v1737 = vld [vmem:[%s12] sm:$0x1]
        %v1739 = vlaneseq
        %v1740 = vshrl.u32 %v1739, 7
        %v1741 = vsub.s32 0, %v1740
        %v1742 = vrot.slane %v1737, %v1741
        %v1744 = vmul.f32 %v1736, %v1742
        %v1745 = vld [vmem:[%s13] sm:$0x1]
        %v1747 = vlaneseq
        %v1748 = vshrl.u32 %v1747, 7
        %v1749 = vsub.s32 0, %v1748
        %v1750 = vrot.slane %v1745, %v1749
        %v1752 = vadd.f32 %v1744, %v1750
        %1753 = vst.msk [vmem:[%s679] sm:$0xff] %vm702, %v1752
        %1754 = vst.msk [vmem:[%s686] sm:$0xff] %vm702, %v1637
        %s1755 = sand.u32 %s366, 1
        %s1756 = scalar_lea.sflag [#allocation4], %s1755
        %s1757 = sand.u32 %s366, 1
        %s1758 = smul.addr %s1757, 8
        %s1759 = scalar_lea.vmem [#allocation16], %s1758
        %s1760 = sand.u32 %s392, 1
        %s1761 = scalar_lea.sflag [#allocation18], %s1760
        %s1762 = sand.u32 %s392, 1
        %s1763 = smul.addr %s1762, 8
        %s1764 = scalar_lea.vmem [#allocation17], %s1763
        // Predicated region
        $region109: #{tpu_custom_call.1} parent=75 // pred_check
          %p1765 = pneg %p376
        $region110: #{tpu_custom_call.1} parent=75 // pred_check_branch
          %1767 = sbr.rel (%p1765) target = $region112
        $region111: #{tpu_custom_call.1} parent=75 // pred_region
          %s1769 = ssub.s32 128, 128
          %1770 = vsyncadd %s1756, %s1769
          %s1771 = smul.addr %s44, 128
          %s1772 = scalar_lea.hbm %s14, %s1771
          %s1774 = sshll.u32 %s1759, 4
          %s1775 = int_to_ptr.vmem [resolvable:$true] %s1774
          %1777 = dma.vmem_to_hbm [thread:$0]  %s1775, 128, %s1772, %s1756
        $region112: #{tpu_custom_call.1} parent=75 // pred_fallthru
          _
        // Predicated region
        $region113: #{tpu_custom_call.1} parent=75 // pred_check
          %p1778 = pneg %p402
        $region114: #{tpu_custom_call.1} parent=75 // pred_check_branch
          %1780 = sbr.rel (%p1778) target = $region116
        $region115: #{tpu_custom_call.1} parent=75 // pred_region
          %s1782 = ssub.s32 128, 128
          %1783 = vsyncadd %s1761, %s1782
          %s1784 = smul.addr %s44, 128
          %s1785 = scalar_lea.hbm %s15, %s1784
          %s1787 = sshll.u32 %s1764, 4
          %s1788 = int_to_ptr.vmem [resolvable:$true] %s1787
          %1790 = dma.vmem_to_hbm [thread:$0]  %s1788, 128, %s1785, %s1761
        $region116: #{tpu_custom_call.1} parent=75 // pred_fallthru
          _
      $region76: #{tpu_custom_call.1} parent=5 // pred_fallthru
        _
      %p1791 = scmp.le.s32.totalorder 2, %s39
      // Predicated region
      $region117: #{tpu_custom_call.1} parent=5 // pred_check
        %p1792 = pneg %p1791
      $region118: #{tpu_custom_call.1} parent=5 // pred_check_branch
        %1794 = sbr.rel (%p1792) target = $region120
      $region119: #{tpu_custom_call.1} parent=5 // pred_region
        %s1795 = ssub.s32 %s39, 2
        // Predicated region
        $region121: #{tpu_custom_call.1} parent=119 // pred_check
          %p1796 = pneg %p382
        $region122: #{tpu_custom_call.1} parent=119 // pred_check_branch
          %1798 = sbr.rel (%p1796) target = $region124
        $region123: #{tpu_custom_call.1} parent=119 // pred_region
          %s1799 = sand.u32 %s367, 1
          %s1800 = scalar_lea.sflag [#allocation4], %s1799
          %s1801 = sand.u32 %s367, 1
          %s1802 = smul.addr %s1801, 8
          %s1803 = scalar_lea.vmem [#allocation16], %s1802
          %1804 = dma.done %s1800, 128
        $region124: #{tpu_custom_call.1} parent=119 // pred_fallthru
          _
        // Predicated region
        $region125: #{tpu_custom_call.1} parent=119 // pred_check
          %p1805 = pneg %p408
        $region126: #{tpu_custom_call.1} parent=119 // pred_check_branch
          %1807 = sbr.rel (%p1805) target = $region128
        $region127: #{tpu_custom_call.1} parent=119 // pred_region
          %s1808 = sand.u32 %s393, 1
          %s1809 = scalar_lea.sflag [#allocation18], %s1808
          %s1810 = sand.u32 %s393, 1
          %s1811 = smul.addr %s1810, 8
          %s1812 = scalar_lea.vmem [#allocation17], %s1811
          %1813 = dma.done %s1809, 128
        $region128: #{tpu_custom_call.1} parent=119 // pred_fallthru
          _
      $region120: #{tpu_custom_call.1} parent=5 // pred_fallthru
        _
    $region6: #{tpu_custom_call.1} parent=1 // loop_footer
      %s43 = sadd.s32 1, %s39
    $region7: #{tpu_custom_call.1} parent=1 // loop_footer_branch
      %38 = sbr.rel target = $region3
    $region8: #{tpu_custom_call.1} parent=1 // loop_exit
      _
    %1814 = vsyncpa [#allocation3], 1
    %s1815 = scalar_lea.sflag [#allocation3], 1
    %1816 = vsyncpa %s1815, 1
    %1817 = vsyncpa [#allocation6], 1
    %s1818 = scalar_lea.sflag [#allocation6], 1
    %1819 = vsyncpa %s1818, 1
    %1820 = vsyncpa [#allocation9], 1
    %s1821 = scalar_lea.sflag [#allocation9], 1
    %1822 = vsyncpa %s1821, 1
    %1823 = vsyncpa [#allocation12], 1
    %1824 = vsyncpa [#allocation15], 1
    %1825 = vsyncpa [#allocation4], 1
    %s1826 = scalar_lea.sflag [#allocation4], 1
    %1827 = vsyncpa %s1826, 1
    %1828 = vsyncpa [#allocation18], 1
    %s1829 = scalar_lea.sflag [#allocation18], 1
    %1830 = vsyncpa %s1829, 1

</llo_original>
